<compile_context>
chip_gen: v6e
topology: v6e:2x2x1
jax: 0.10.0
libtpu: 0.0.40
codegen_flags: <defaults>
</compile_context>

<pallas_src>
import functools

import jax
import jax.numpy as jnp
from jax import lax
from jax.experimental import pallas as pl
from jax.experimental.pallas import tpu as pltpu


def _conv_stats_kernel(x_ref, w_ref, y_ref, stats_ref, cols_ref,
                       *, KH, KW, Ho, Wo, Cin, stride):
    """Pass 1: conv for one batch element + per-channel partial BN stats.

    x_ref:     (Cin, Hp, Wp)       padded image (batch dim squeezed by grid)
    w_ref:     (Cout, KH*KW*Cin)   weights, im2col ordering (tap-major, Cin-minor)
    y_ref:     (Cout, Ho*Wo)       conv output, channels-major, lane-dense, f32
    stats_ref: (Cout, 2)           [:,0]=sum over spatial, [:,1]=sum of squares
    cols_ref:  (KH*KW*Cin, Ho*Wo)  VMEM scratch: im2col operand (built once)
    """
    P = Ho * Wo

    # Build the im2col operand once in VMEM (tap-major rows, spatial in lanes).
    tap = 0
    for kh in range(KH):
        for kw in range(KW):
            if stride == 1:
                patch = x_ref[:, kh:kh + Ho, kw:kw + Wo]          # (Cin, Ho, Wo)
            else:
                # TODO(synk): on v5e prefer a contiguous slab load + in-register
                #             subsample instead of strided sublane loads.
                patch = x_ref[:, pl.ds(kh, Ho, stride=stride),
                              pl.ds(kw, Wo, stride=stride)]
            cols_ref[tap * Cin:(tap + 1) * Cin, :] = (
                patch.reshape(Cin, P).astype(cols_ref.dtype))
            tap += 1

    # Single MXU matmul, K = KH*KW*Cin, result (Cout, Ho*Wo) is lane-dense.
    # (For large channel counts on v6e/v7x, cast w/cols to bf16 and keep the
    #  f32 accumulator; at Cin=4/Cout=8 f32 is kept for exactness.)
    acc = jnp.dot(w_ref[...].astype(cols_ref.dtype), cols_ref[...],
                  preferred_element_type=jnp.float32)             # (Cout, P)

    y_ref[...] = acc.astype(y_ref.dtype)

    # Per-image partial stats (lane reduction); combined globally outside so
    # BN statistics stay exact across the whole batch even though the grid is
    # "parallel" over N (no cross-step accumulation race on v7x's 2 cores).
    stats_ref[:, 0:1] = jnp.sum(acc, axis=1, keepdims=True)
    stats_ref[:, 1:2] = jnp.sum(acc * acc, axis=1, keepdims=True)


def _bn_relu_kernel(y_ref, scale_ref, shift_ref, o_ref):
    """Pass 2: y * scale + shift, then ReLU.  All lane-dense (Ho*Wo lanes).

    y_ref:     (Cout, Ho*Wo) f32 conv output
    scale_ref: (Cout, 1)     gamma * rsqrt(var + eps)   (hoisted broadcast)
    shift_ref: (Cout, 1)     beta - mean * scale
    o_ref:     (Cout, Ho*Wo) output block
    """
    z = y_ref[...] * scale_ref[...] + shift_ref[...]
    o_ref[...] = jnp.maximum(z, 0.0).astype(o_ref.dtype)


def conv_basic_forward(x, weight, gamma, beta, *, stride=1, padding=1, eps=1e-5):
    """ConvBasic forward. x: NCHW, weight: OIHW, returns NCHW."""
    N, Cin, H, W = x.shape
    Cout, Cin_w, KH, KW = weight.shape
    assert Cin_w == Cin
    Ho = (H + 2 * padding - KH) // stride + 1
    Wo = (W + 2 * padding - KW) // stride + 1
    Hp, Wp = H + 2 * padding, W + 2 * padding
    P = Ho * Wo
    K = KH * KW * Cin

    # Zero-pad H/W (cheap, no layout change; no NCHW<->NHWC transposes needed).
    x_pad = jnp.pad(x, ((0, 0), (0, 0), (padding, padding), (padding, padding)))
    # (Cout, Cin, KH, KW) -> (Cout, KH*KW*Cin) matching the in-kernel im2col
    # ordering (tap-major, Cin-minor). 288 elements: negligible wrapper work.
    w_mat = jnp.transpose(weight, (0, 2, 3, 1)).reshape(Cout, K).astype(jnp.float32)

    cparams = pltpu.CompilerParams(
        dimension_semantics=("parallel",),            # batch axis -> v7x 2 TCs
        vmem_limit_bytes=48 * 1024 * 1024)            # explicit; < v7x 64 MiB

    kernel1 = functools.partial(
        _conv_stats_kernel, KH=KH, KW=KW, Ho=Ho, Wo=Wo, Cin=Cin, stride=stride)

    # ---- Pass 1: conv (one K=KH*KW*Cin matmul per image) + partial stats ----
    y, stats = pl.pallas_call(
        kernel1,
        out_shape=(jax.ShapeDtypeStruct((N, Cout, P), jnp.float32),
                   jax.ShapeDtypeStruct((N, Cout, 2), jnp.float32)),
        grid=(N,),
        in_specs=[
            pl.BlockSpec((None, Cin, Hp, Wp), lambda n: (n, 0, 0, 0)),
            pl.BlockSpec((Cout, K), lambda n: (0, 0)),
        ],
        out_specs=(
            pl.BlockSpec((None, Cout, P), lambda n: (n, 0, 0)),
            pl.BlockSpec((None, Cout, 2), lambda n: (n, 0, 0)),
        ),
        scratch_shapes=[pltpu.VMEM((K, P), jnp.float32)],
        compiler_params=cparams,
    )(x_pad, w_mat)

    # ---- Tiny per-channel glue: global training-mode BN stats -> affine -----
    count = float(N * P)
    total = jnp.sum(stats[:, :, 0], axis=0)                   # (Cout,)
    total_sq = jnp.sum(stats[:, :, 1], axis=0)                 # (Cout,)
    mean = total / count
    var = total_sq / count - mean * mean                       # biased variance
    scale1 = gamma.astype(jnp.float32) * lax.rsqrt(var + eps)  # (Cout,)
    shift1 = beta.astype(jnp.float32) - mean * scale1          # (Cout,)
    scale = scale1.reshape(Cout, 1)
    shift = shift1.reshape(Cout, 1)

    # ---- Pass 2: normalize + affine + ReLU (lane-dense elementwise) ---------
    out_flat = pl.pallas_call(
        _bn_relu_kernel,
        out_shape=jax.ShapeDtypeStruct((N, Cout, P), x.dtype),
        grid=(N,),
        in_specs=[
            pl.BlockSpec((None, Cout, P), lambda n: (n, 0, 0)),
            pl.BlockSpec((Cout, 1), lambda n: (0, 0)),
            pl.BlockSpec((Cout, 1), lambda n: (0, 0)),
        ],
        out_specs=pl.BlockSpec((None, Cout, P), lambda n: (n, 0, 0)),
        compiler_params=cparams,
    )(y, scale, shift)

    # Free row-major split of the trailing spatial dim back to (Ho, Wo).
    return out_flat.reshape(N, Cout, Ho, Wo)


def _reference(x_nchw, weight_oihw, gamma, beta, *, stride, padding, eps):
    """Pure-JAX reference mirroring PyTorch ConvBasic (training-mode BN)."""
    y = lax.conv_general_dilated(
        x_nchw, weight_oihw,
        window_strides=(stride, stride),
        padding=[(padding, padding), (padding, padding)],
        dimension_numbers=("NCHW", "OIHW", "NCHW"))
    mean = jnp.mean(y, axis=(0, 2, 3), keepdims=True)
    var = jnp.mean(jnp.square(y - mean), axis=(0, 2, 3), keepdims=True)
    y_hat = (y - mean) * lax.rsqrt(var + eps)
    z = y_hat * gamma.reshape(1, -1, 1, 1) + beta.reshape(1, -1, 1, 1)
    return jnp.maximum(z, 0.0)


if __name__ == "__main__":
    # ConvBasic(nIn=4, nOut=8, kernel=3, stride=1, padding=1)
    N, Cin, H, W = 2, 4, 16, 16
    Cout, KSZ, STRIDE, PAD = 8, 3, 1, 1
    EPS = 1e-5

    key = jax.random.PRNGKey(0)
    kx, kwt, kg, kb = jax.random.split(key, 4)

    x = jax.random.normal(kx, (N, Cin, H, W), dtype=jnp.float32)
    fan_in = Cin * KSZ * KSZ
    weight = jax.random.normal(kwt, (Cout, Cin, KSZ, KSZ),
                               dtype=jnp.float32) / jnp.sqrt(fan_in)
    gamma = 1.0 + 0.1 * jax.random.normal(kg, (Cout,), dtype=jnp.float32)
    beta = 0.1 * jax.random.normal(kb, (Cout,), dtype=jnp.float32)

    out = conv_basic_forward(x, weight, gamma, beta,
                             stride=STRIDE, padding=PAD, eps=EPS)
    out = jax.block_until_ready(out)

    ref = _reference(x, weight, gamma, beta, stride=STRIDE, padding=PAD, eps=EPS)
    assert out.shape == ref.shape == (N, Cout, H, W)
    assert jnp.allclose(out, ref, atol=1e-2, rtol=1e-2), (
        f"max abs err {jnp.max(jnp.abs(out - ref))}")

    print("KERNEL_OK")
</pallas_src>

<mosaic_0001>
module attributes {stable_mosaic.version = 11 : i64} {
  func.func @_conv_stats_kernel(%arg0: i32, %arg1: memref<1x4x18x18xf32, #tpu.memory_space<vmem>>, %arg2: memref<8x36xf32, #tpu.memory_space<vmem>>, %arg3: memref<1x8x256xf32, #tpu.memory_space<vmem>>, %arg4: memref<1x8x2xf32, #tpu.memory_space<vmem>>, %arg5: memref<36x256xf32, #tpu.memory_space<vmem>>) attributes {dimension_semantics = [#tpu.dimension_semantics<parallel>], iteration_bounds = array<i64: 2>, scalar_prefetch = 0 : i64, scratch_operands = 1 : i64, tpu.core_type = #tpu.core_type<tc>, window_params = [{transform_indices = @transform_0, window_bounds = array<i64: 1, 4, 18, 18>}, {pipeline_mode = #tpu.pipeline_mode<synchronous>, transform_indices = @transform_1, window_bounds = array<i64: 8, 36>}, {transform_indices = @transform_2, window_bounds = array<i64: 1, 8, 256>}, {transform_indices = @transform_3, window_bounds = array<i64: 1, 8, 2>}]} {
    %c0 = arith.constant 0 : index
    %c0_0 = arith.constant 0 : index
    %c0_1 = arith.constant 0 : index
    %c0_2 = arith.constant 0 : index
    %0 = vector.load %arg1[%c0, %c0_0, %c0_1, %c0_2] : memref<1x4x18x18xf32, #tpu.memory_space<vmem>>, vector<1x4x16x16xf32>
    %1 = vector.shape_cast %0 : vector<1x4x16x16xf32> to vector<4x16x16xf32>
    %2 = vector.shape_cast %1 : vector<4x16x16xf32> to vector<4x256xf32>
    %c0_3 = arith.constant 0 : index
    %c0_4 = arith.constant 0 : index
    %3 = vector.load %arg5[%c0_3, %c0_4] : memref<36x256xf32, #tpu.memory_space<vmem>>, vector<4x256xf32>
    tpu.vector_store %arg5[%c0_3, %c0_4], %2 {strides = array<i32>} : memref<36x256xf32, #tpu.memory_space<vmem>>, vector<4x256xf32>,
    %c0_5 = arith.constant 0 : index
    %c0_6 = arith.constant 0 : index
    %c0_7 = arith.constant 0 : index
    %c1 = arith.constant 1 : index
    %4 = vector.load %arg1[%c0_5, %c0_6, %c0_7, %c1] : memref<1x4x18x18xf32, #tpu.memory_space<vmem>>, vector<1x4x16x16xf32>
    %5 = vector.shape_cast %4 : vector<1x4x16x16xf32> to vector<4x16x16xf32>
    %6 = vector.shape_cast %5 : vector<4x16x16xf32> to vector<4x256xf32>
    %c4 = arith.constant 4 : index
    %c0_8 = arith.constant 0 : index
    %7 = vector.load %arg5[%c4, %c0_8] : memref<36x256xf32, #tpu.memory_space<vmem>>, vector<4x256xf32>
    tpu.vector_store %arg5[%c4, %c0_8], %6 {strides = array<i32>} : memref<36x256xf32, #tpu.memory_space<vmem>>, vector<4x256xf32>,
    %c0_9 = arith.constant 0 : index
    %c0_10 = arith.constant 0 : index
    %c0_11 = arith.constant 0 : index
    %c2 = arith.constant 2 : index
    %8 = vector.load %arg1[%c0_9, %c0_10, %c0_11, %c2] : memref<1x4x18x18xf32, #tpu.memory_space<vmem>>, vector<1x4x16x16xf32>
    %9 = vector.shape_cast %8 : vector<1x4x16x16xf32> to vector<4x16x16xf32>
    %10 = vector.shape_cast %9 : vector<4x16x16xf32> to vector<4x256xf32>
    %c8 = arith.constant 8 : index
    %c0_12 = arith.constant 0 : index
    %11 = vector.load %arg5[%c8, %c0_12] : memref<36x256xf32, #tpu.memory_space<vmem>>, vector<4x256xf32>
    tpu.vector_store %arg5[%c8, %c0_12], %10 {strides = array<i32>} : memref<36x256xf32, #tpu.memory_space<vmem>>, vector<4x256xf32>,
    %c0_13 = arith.constant 0 : index
    %c0_14 = arith.constant 0 : index
    %c1_15 = arith.constant 1 : index
    %c0_16 = arith.constant 0 : index
    %12 = vector.load %arg1[%c0_13, %c0_14, %c1_15, %c0_16] : memref<1x4x18x18xf32, #tpu.memory_space<vmem>>, vector<1x4x16x16xf32>
    %13 = vector.shape_cast %12 : vector<1x4x16x16xf32> to vector<4x16x16xf32>
    %14 = vector.shape_cast %13 : vector<4x16x16xf32> to vector<4x256xf32>
    %c12 = arith.constant 12 : index
    %c0_17 = arith.constant 0 : index
    %15 = vector.load %arg5[%c12, %c0_17] : memref<36x256xf32, #tpu.memory_space<vmem>>, vector<4x256xf32>
    tpu.vector_store %arg5[%c12, %c0_17], %14 {strides = array<i32>} : memref<36x256xf32, #tpu.memory_space<vmem>>, vector<4x256xf32>,
    %c0_18 = arith.constant 0 : index
    %c0_19 = arith.constant 0 : index
    %c1_20 = arith.constant 1 : index
    %c1_21 = arith.constant 1 : index
    %16 = vector.load %arg1[%c0_18, %c0_19, %c1_20, %c1_21] : memref<1x4x18x18xf32, #tpu.memory_space<vmem>>, vector<1x4x16x16xf32>
    %17 = vector.shape_cast %16 : vector<1x4x16x16xf32> to vector<4x16x16xf32>
    %18 = vector.shape_cast %17 : vector<4x16x16xf32> to vector<4x256xf32>
    %c16 = arith.constant 16 : index
    %c0_22 = arith.constant 0 : index
    %19 = vector.load %arg5[%c16, %c0_22] : memref<36x256xf32, #tpu.memory_space<vmem>>, vector<4x256xf32>
    tpu.vector_store %arg5[%c16, %c0_22], %18 {strides = array<i32>} : memref<36x256xf32, #tpu.memory_space<vmem>>, vector<4x256xf32>,
    %c0_23 = arith.constant 0 : index
    %c0_24 = arith.constant 0 : index
    %c1_25 = arith.constant 1 : index
    %c2_26 = arith.constant 2 : index
    %20 = vector.load %arg1[%c0_23, %c0_24, %c1_25, %c2_26] : memref<1x4x18x18xf32, #tpu.memory_space<vmem>>, vector<1x4x16x16xf32>
    %21 = vector.shape_cast %20 : vector<1x4x16x16xf32> to vector<4x16x16xf32>
    %22 = vector.shape_cast %21 : vector<4x16x16xf32> to vector<4x256xf32>
    %c20 = arith.constant 20 : index
    %c0_27 = arith.constant 0 : index
    %23 = vector.load %arg5[%c20, %c0_27] : memref<36x256xf32, #tpu.memory_space<vmem>>, vector<4x256xf32>
    tpu.vector_store %arg5[%c20, %c0_27], %22 {strides = array<i32>} : memref<36x256xf32, #tpu.memory_space<vmem>>, vector<4x256xf32>,
    %c0_28 = arith.constant 0 : index
    %c0_29 = arith.constant 0 : index
    %c2_30 = arith.constant 2 : index
    %c0_31 = arith.constant 0 : index
    %24 = vector.load %arg1[%c0_28, %c0_29, %c2_30, %c0_31] : memref<1x4x18x18xf32, #tpu.memory_space<vmem>>, vector<1x4x16x16xf32>
    %25 = vector.shape_cast %24 : vector<1x4x16x16xf32> to vector<4x16x16xf32>
    %26 = vector.shape_cast %25 : vector<4x16x16xf32> to vector<4x256xf32>
    %c24 = arith.constant 24 : index
    %c0_32 = arith.constant 0 : index
    %27 = vector.load %arg5[%c24, %c0_32] : memref<36x256xf32, #tpu.memory_space<vmem>>, vector<4x256xf32>
    tpu.vector_store %arg5[%c24, %c0_32], %26 {strides = array<i32>} : memref<36x256xf32, #tpu.memory_space<vmem>>, vector<4x256xf32>,
    %c0_33 = arith.constant 0 : index
    %c0_34 = arith.constant 0 : index
    %c2_35 = arith.constant 2 : index
    %c1_36 = arith.constant 1 : index
    %28 = vector.load %arg1[%c0_33, %c0_34, %c2_35, %c1_36] : memref<1x4x18x18xf32, #tpu.memory_space<vmem>>, vector<1x4x16x16xf32>
    %29 = vector.shape_cast %28 : vector<1x4x16x16xf32> to vector<4x16x16xf32>
    %30 = vector.shape_cast %29 : vector<4x16x16xf32> to vector<4x256xf32>
    %c28 = arith.constant 28 : index
    %c0_37 = arith.constant 0 : index
    %31 = vector.load %arg5[%c28, %c0_37] : memref<36x256xf32, #tpu.memory_space<vmem>>, vector<4x256xf32>
    tpu.vector_store %arg5[%c28, %c0_37], %30 {strides = array<i32>} : memref<36x256xf32, #tpu.memory_space<vmem>>, vector<4x256xf32>,
    %c0_38 = arith.constant 0 : index
    %c0_39 = arith.constant 0 : index
    %c2_40 = arith.constant 2 : index
    %c2_41 = arith.constant 2 : index
    %32 = vector.load %arg1[%c0_38, %c0_39, %c2_40, %c2_41] : memref<1x4x18x18xf32, #tpu.memory_space<vmem>>, vector<1x4x16x16xf32>
    %33 = vector.shape_cast %32 : vector<1x4x16x16xf32> to vector<4x16x16xf32>
    %34 = vector.shape_cast %33 : vector<4x16x16xf32> to vector<4x256xf32>
    %c32 = arith.constant 32 : index
    %c0_42 = arith.constant 0 : index
    %35 = vector.load %arg5[%c32, %c0_42] : memref<36x256xf32, #tpu.memory_space<vmem>>, vector<4x256xf32>
    tpu.vector_store %arg5[%c32, %c0_42], %34 {strides = array<i32>} : memref<36x256xf32, #tpu.memory_space<vmem>>, vector<4x256xf32>,
    %c0_43 = arith.constant 0 : index
    %c0_44 = arith.constant 0 : index
    %36 = vector.load %arg2[%c0_43, %c0_44] : memref<8x36xf32, #tpu.memory_space<vmem>>, vector<8x36xf32>
    %c0_45 = arith.constant 0 : index
    %c0_46 = arith.constant 0 : index
    %37 = vector.load %arg5[%c0_45, %c0_46] : memref<36x256xf32, #tpu.memory_space<vmem>>, vector<36x256xf32>
    %cst = arith.constant dense<0.000000e+00> : vector<8x256xf32>
    %38 = tpu.matmul %36, %37, %cst {dimension_numbers = #tpu.dot_dimension_numbers<[1], [0], [0], [1], [0, 0, 1, 1], [], []>} : vector<8x36xf32>, vector<36x256xf32>, vector<8x256xf32> -> vector<8x256xf32>
    %c0_47 = arith.constant 0 : index
    %c0_48 = arith.constant 0 : index
    %c0_49 = arith.constant 0 : index
    %39 = vector.load %arg3[%c0_47, %c0_48, %c0_49] : memref<1x8x256xf32, #tpu.memory_space<vmem>>, vector<1x8x256xf32>
    %40 = vector.shape_cast %39 : vector<1x8x256xf32> to vector<8x256xf32>
    %41 = vector.shape_cast %38 : vector<8x256xf32> to vector<1x8x256xf32>
    tpu.vector_store %arg3[%c0_47, %c0_48, %c0_49], %41 {strides = array<i32>} : memref<1x8x256xf32, #tpu.memory_space<vmem>>, vector<1x8x256xf32>,
    %cst_50 = arith.constant dense<0.000000e+00> : vector<8xf32>
    %42 = vector.multi_reduction <add>, %38, %cst_50 [1] : vector<8x256xf32> to vector<8xf32>
    %43 = vector.shape_cast %42 : vector<8xf32> to vector<8x1xf32>
    %c0_51 = arith.constant 0 : index
    %c0_52 = arith.constant 0 : index
    %c0_53 = arith.constant 0 : index
    %44 = vector.load %arg4[%c0_51, %c0_52, %c0_53] : memref<1x8x2xf32, #tpu.memory_space<vmem>>, vector<1x8x1xf32>
    %45 = vector.shape_cast %44 : vector<1x8x1xf32> to vector<8x1xf32>
    %46 = vector.shape_cast %43 : vector<8x1xf32> to vector<1x8x1xf32>
    tpu.vector_store %arg4[%c0_51, %c0_52, %c0_53], %46 {strides = array<i32>} : memref<1x8x2xf32, #tpu.memory_space<vmem>>, vector<1x8x1xf32>,
    %47 = arith.mulf %38, %38 : vector<8x256xf32>
    %cst_54 = arith.constant dense<0.000000e+00> : vector<8xf32>
    %48 = vector.multi_reduction <add>, %47, %cst_54 [1] : vector<8x256xf32> to vector<8xf32>
    %49 = vector.shape_cast %48 : vector<8xf32> to vector<8x1xf32>
    %c0_55 = arith.constant 0 : index
    %c0_56 = arith.constant 0 : index
    %c1_57 = arith.constant 1 : index
    %50 = vector.load %arg4[%c0_55, %c0_56, %c1_57] : memref<1x8x2xf32, #tpu.memory_space<vmem>>, vector<1x8x1xf32>
    %51 = vector.shape_cast %50 : vector<1x8x1xf32> to vector<8x1xf32>
    %52 = vector.shape_cast %49 : vector<8x1xf32> to vector<1x8x1xf32>
    tpu.vector_store %arg4[%c0_55, %c0_56, %c1_57], %52 {strides = array<i32>} : memref<1x8x2xf32, #tpu.memory_space<vmem>>, vector<1x8x1xf32>,
    return
  }
  func.func @transform_0(%arg0: i32) -> (i32, i32, i32, i32) {
    %c0_i32 = arith.constant 0 : i32
    %c0_i32_0 = arith.constant 0 : i32
    %c0_i32_1 = arith.constant 0 : i32
    %c0_i32_2 = arith.constant 0 : i32
    return %arg0, %c0_i32, %c0_i32_0, %c0_i32_1 : i32, i32, i32, i32
  }
  func.func @transform_1(%arg0: i32) -> (i32, i32) {
    %c0_i32 = arith.constant 0 : i32
    %c0_i32_0 = arith.constant 0 : i32
    %c0_i32_1 = arith.constant 0 : i32
    return %c0_i32, %c0_i32_0 : i32, i32
  }
  func.func @transform_2(%arg0: i32) -> (i32, i32, i32) {
    %c0_i32 = arith.constant 0 : i32
    %c0_i32_0 = arith.constant 0 : i32
    %c0_i32_1 = arith.constant 0 : i32
    return %arg0, %c0_i32, %c0_i32_0 : i32, i32, i32
  }
  func.func @transform_3(%arg0: i32) -> (i32, i32, i32) {
    %c0_i32 = arith.constant 0 : i32
    %c0_i32_0 = arith.constant 0 : i32
    %c0_i32_1 = arith.constant 0 : i32
    return %arg0, %c0_i32, %c0_i32_0 : i32, i32, i32
  }
}

</mosaic_0001>

<llo_original>
// kernel: tpu_custom_call.1
$region0: #{tpu_custom_call.1}
  #allocation0 [shape = 'u32[]', space=smem, size = 0x4, offset = 0x4, fixed_abs, tag = 'smem constant byte address 0x4 - core index']
  #allocation1 [shape = 'u32[144,128]{1,0:T(1,128)}', space=vmem, size = 0x12000, scoped, tag = 'internal scratch']
  #allocation2 [shape = 'f32[36,256]{1,0:T(8,128)}', space=vmem, size = 0xa000, scoped, tag = 'scratch operand']
  %s0 = inlined_call_operand.vmem [shape: f32[2,4,18,18], index: 0, kind: input, shape index: {}]
  %s1 = inlined_call_operand.vmem [shape: f32[8,36], index: 1, kind: input, shape index: {}]
  %s2 = inlined_call_operand.hbm [shape: f32[2,8,256], index: 2, kind: output, shape index: {0}]
  %s3 = inlined_call_operand.vmem [shape: f32[2,8,2], index: 3, kind: output, shape index: {1}]
  %4 = xla_tuple %s2, %s3
  %s5 = sld [smem:[#allocation0]]
  $region49: #{tpu_custom_call.1} parent=0
    _
  %s7 = ssub.s32 1, %s5
  %s8 = scalar_select 0, %s7, %s5
  $region1: #{tpu_custom_call.1} parent=0
    #allocation3 [shape = 'u8[16384]{0}', space=vmem, size = 0x4000, scoped, tag = 'output window, operand 0']
    #allocation4 [shape = 's32[2]{0}', space=sflag, size = 0x8, scoped, tag = 'scoped memory for tpu_custom_call.1']
    %9 = vsyncpa [#allocation4], 0
    %s10 = scalar_lea.sflag [#allocation4], 1
    %11 = vsyncpa %s10, 0
    loop: start=0, step=1, limit=4
    $region2: #{tpu_custom_call.1} parent=1 // loop_pre_header
      _
    $region3: #{tpu_custom_call.1} parent=1 // loop_header
      %s13 = sphi 0, %s17
      %p14 = scmp.ge.s32.totalorder %s13, 4
      %s23 = sphi 0, %s25
      %s26 = sphi 0, %s23
      %s27 = sphi 0, %s26
      %s43 = sphi 0, %s27
      %s47 = sphi 0, %s47
      %s49 = sphi 0, %s47
      %s50 = sphi 0, %s49
      %s64 = sphi 0, %s50
      %s70 = sphi 0, %s72
      %s73 = sphi 0, %s70
      %s74 = sphi 0, %s73
      %s90 = sphi 0, %s74
      %s96 = sphi 0, %s98
      %s99 = sphi 0, %s96
      %s100 = sphi 0, %s99
      %s116 = sphi 0, %s100
    $region4: #{tpu_custom_call.1} parent=1 // loop_header_branch
      %16 = sbr.rel (%p14) target = $region8
    $region5: #{tpu_custom_call.1} parent=1 // loop_body
      %s18 = ssub.s32 %s13, 1
      %s19 = ssub.s32 %s13, 2
      %s20 = sadd.s32 %s13, 1
      %s21 = ssub.s32 %s13, %s20
      %p22 = scmp.eq.s32.totalorder %s21, 0
      %s24 = sadd.s32 %s23, 1
      %s25 = scalar_select %p22, %s23, %s24
      %p28 = pneg %p22
      %p29 = scmp.eq.s32.totalorder %s13, 1
      %p30 = por %p28, %p29
      %p31 = scmp.ne.s32.totalorder %s23, %s26
      %p32 = scmp.eq.s32.totalorder %s13, 0
      %p33 = por %p31, %p32
      %p34 = scmp.ne.s32.totalorder %s23, %s26
      %p35 = scmp.eq.s32.totalorder %s18, 1
      %p36 = por %p34, %p35
      %p37 = scmp.ne.s32.totalorder %s26, %s27
      %p38 = scmp.eq.s32.totalorder %s18, 0
      %p39 = por %p37, %p38
      %p40 = scmp.ne.s32.totalorder %s26, %s27
      %p41 = scmp.eq.s32.totalorder %s19, 1
      %p42 = por %p40, %p41
      %p44 = scmp.ne.s32.totalorder %s27, %s43
      %p45 = scmp.eq.s32.totalorder %s19, 0
      %p46 = por %p44, %p45
      %s48 = sadd.s32 %s47, 1
      %p51 = scmp.eq.s32.totalorder %s13, 1
      %p52 = scmp.ne.s32.totalorder %s47, %s49
      %p53 = scmp.eq.s32.totalorder %s13, 0
      %p54 = por %p52, %p53
      %p55 = scmp.ne.s32.totalorder %s47, %s49
      %p56 = scmp.eq.s32.totalorder %s18, 1
      %p57 = por %p55, %p56
      %p58 = scmp.ne.s32.totalorder %s49, %s50
      %p59 = scmp.eq.s32.totalorder %s18, 0
      %p60 = por %p58, %p59
      %p61 = scmp.ne.s32.totalorder %s49, %s50
      %p62 = scmp.eq.s32.totalorder %s19, 1
      %p63 = por %p61, %p62
      %p65 = scmp.ne.s32.totalorder %s50, %s64
      %p66 = scmp.eq.s32.totalorder %s19, 0
      %p67 = por %p65, %p66
      %s68 = ssub.s32 %s13, %s20
      %p69 = scmp.eq.s32.totalorder %s68, 0
      %s71 = sadd.s32 %s70, 1
      %s72 = scalar_select %p69, %s70, %s71
      %p75 = pneg %p69
      %p76 = scmp.eq.s32.totalorder %s13, 1
      %p77 = por %p75, %p76
      %p78 = scmp.ne.s32.totalorder %s70, %s73
      %p79 = scmp.eq.s32.totalorder %s13, 0
      %p80 = por %p78, %p79
      %p81 = scmp.ne.s32.totalorder %s70, %s73
      %p82 = scmp.eq.s32.totalorder %s18, 1
      %p83 = por %p81, %p82
      %p84 = scmp.ne.s32.totalorder %s73, %s74
      %p85 = scmp.eq.s32.totalorder %s18, 0
      %p86 = por %p84, %p85
      %p87 = scmp.ne.s32.totalorder %s73, %s74
      %p88 = scmp.eq.s32.totalorder %s19, 1
      %p89 = por %p87, %p88
      %p91 = scmp.ne.s32.totalorder %s74, %s90
      %p92 = scmp.eq.s32.totalorder %s19, 0
      %p93 = por %p91, %p92
      %s94 = ssub.s32 %s13, %s20
      %p95 = scmp.eq.s32.totalorder %s94, 0
      %s97 = sadd.s32 %s96, 1
      %s98 = scalar_select %p95, %s96, %s97
      %p101 = pneg %p95
      %p102 = scmp.eq.s32.totalorder %s13, 1
      %p103 = por %p101, %p102
      %p104 = scmp.ne.s32.totalorder %s96, %s99
      %p105 = scmp.eq.s32.totalorder %s13, 0
      %p106 = por %p104, %p105
      %p107 = scmp.ne.s32.totalorder %s96, %s99
      %p108 = scmp.eq.s32.totalorder %s18, 1
      %p109 = por %p107, %p108
      %p110 = scmp.ne.s32.totalorder %s99, %s100
      %p111 = scmp.eq.s32.totalorder %s18, 0
      %p112 = por %p110, %p111
      %p113 = scmp.ne.s32.totalorder %s99, %s100
      %p114 = scmp.eq.s32.totalorder %s19, 1
      %p115 = por %p113, %p114
      %p117 = scmp.ne.s32.totalorder %s100, %s116
      %p118 = scmp.eq.s32.totalorder %s19, 0
      %p119 = por %p117, %p118
      %p120 = scmp.le.s32.totalorder 1, %s13
      %p121 = scmp.lt.s32.totalorder %s13, 3
      %p122 = pnand %p120, %p121
      %p123 = pneg %p122
      // Predicated region
      $region9: #{tpu_custom_call.1} parent=5 // pred_check
        _
      $region10: #{tpu_custom_call.1} parent=5 // pred_check_branch
        %125 = sbr.rel (%p122) target = $region12
      $region11: #{tpu_custom_call.1} parent=5 // pred_region
        %s126 = ssub.s32 %s13, 1
        // Predicated region
        $region13: #{tpu_custom_call.1} parent=11 // pred_check
          %p127 = pneg %p60
        $region14: #{tpu_custom_call.1} parent=11 // pred_check_branch
          %129 = sbr.rel (%p127) target = $region16
        $region15: #{tpu_custom_call.1} parent=11 // pred_region
          _
        $region16: #{tpu_custom_call.1} parent=11 // pred_fallthru
          _
      $region12: #{tpu_custom_call.1} parent=5 // pred_fallthru
        _
      %p130 = scmp.lt.s32.totalorder %s13, 2
      // Predicated region
      $region17: #{tpu_custom_call.1} parent=5 // pred_check
        %p131 = pneg %p130
      $region18: #{tpu_custom_call.1} parent=5 // pred_check_branch
        %133 = sbr.rel (%p131) target = $region20
      $region19: #{tpu_custom_call.1} parent=5 // pred_region
        // Predicated region
        $region21: #{tpu_custom_call.1} parent=19 // pred_check
          %p134 = pneg %p33
        $region22: #{tpu_custom_call.1} parent=19 // pred_check_branch
          %136 = sbr.rel (%p134) target = $region24
        $region23: #{tpu_custom_call.1} parent=19 // pred_region
          %p137 = scmp.lt.s32.totalorder %s13, 1
          %s138 = scalar_select %p137, %s13, 1
          %s139 = smul.addr %s138, 12
          %s140 = smul.addr %s139, 8
          %s141 = scalar_lea.vmem %s0, %s140
        $region24: #{tpu_custom_call.1} parent=19 // pred_fallthru
          _
      $region20: #{tpu_custom_call.1} parent=5 // pred_fallthru
        _
      %p142 = scmp.le.s32.totalorder 1, %s13
      %p143 = scmp.lt.s32.totalorder %s13, 3
      %p144 = pnand %p142, %p143
      %p145 = pneg %p144
      // Predicated region
      $region25: #{tpu_custom_call.1} parent=5 // pred_check
        _
      $region26: #{tpu_custom_call.1} parent=5 // pred_check_branch
        %147 = sbr.rel (%p144) target = $region28
      $region27: #{tpu_custom_call.1} parent=5 // pred_region
        %s148 = ssub.s32 %s13, 1
        %p149 = scmp.lt.s32.totalorder %s18, 1
        %s150 = scalar_select %p149, %s18, 1
        %s151 = smul.addr %s150, 12
        %s152 = smul.addr %s151, 8
        %s153 = scalar_lea.vmem %s0, %s152
        %p154 = pneg %p39
        %p155 = pneg %p36
        %p156 = pneg %p60
        %p157 = pneg %p57
        %p158 = pneg %p86
        %p159 = pneg %p83
        %s160 = sand.u32 %s73, 1
        %s161 = scalar_lea.sflag [#allocation4], %s160
        %s162 = sand.u32 %s73, 1
        %s163 = smul.addr %s162, 16
        %s164 = scalar_lea.vmem [#allocation3], %s163
        %p165 = pneg %p112
        %p166 = pneg %p109
        %p167 = scmp.lt.s32.totalorder %s18, 1
        %s168 = scalar_select %p167, %s18, 1
        %s169 = smul.addr %s168, 8
        %s170 = scalar_lea.vmem %s3, %s169
        %p171 = scmp.lt.s32.totalorder %s18, 1
        %s172 = scalar_select %p171, %s18, 1
        %s173 = smul.addr %s172, 12
        %s174 = smul.addr %s173, 8
        %s175 = scalar_lea.vmem %s0, %s174
        %p176 = scmp.lt.s32.totalorder %s18, 1
        %s177 = scalar_select %p176, %s18, 1
        %s178 = smul.addr %s177, 8
        %s179 = scalar_lea.vmem %s3, %s178
        %v180 = vld [vmem:[%s175] sm:$0xff]
        %v181 = vld [vmem:[%s175 + $0x8] sm:$0xff]
        %v182 = vld [vmem:[%s175 + $0x18] sm:$0xff]
        %v183 = vld [vmem:[%s175 + $0x20] sm:$0xff]
        %v184 = vld [vmem:[%s175 + $0x30] sm:$0xff]
        %v185 = vld [vmem:[%s175 + $0x38] sm:$0xff]
        %v186 = vld [vmem:[%s175 + $0x48] sm:$0xff]
        %v187 = vld [vmem:[%s175 + $0x50] sm:$0xff]
        %v188 = vcombine.low %v180, %v184
        %v189 = vcombine.high %v180, %v184
        %v191 = vunpack.c.l.s4 1983009808
        %v192 = vunpack.c.0.s8 %v191
        %v193 = vlaneseq
        %v194 = vshrl.u32 %v193, 7
        %v195 = vsub.s32 %v192, %v194
        %v196 = vrot.slane %v188, %v195
        %v198 = vunpack.c.l.s4 1983009808
        %v199 = vunpack.c.0.s8 %v198
        %v200 = vlaneseq
        %v201 = vshrl.u32 %v200, 7
        %v202 = vsub.s32 %v199, %v201
        %v203 = vrot.slane %v189, %v202
        %v204 = vcombine.low %v182, %v186
        %v205 = vcombine.high %v182, %v186
        %v207 = vunpack.c.l.s4 1983009808
        %v208 = vunpack.c.0.s8 %v207
        %v209 = vlaneseq
        %v210 = vshrl.u32 %v209, 7
        %v211 = vsub.s32 %v208, %v210
        %v212 = vrot.slane %v204, %v211
        %v214 = vunpack.c.l.s4 1983009808
        %v215 = vunpack.c.0.s8 %v214
        %v216 = vlaneseq
        %v217 = vshrl.u32 %v216, 7
        %v218 = vsub.s32 %v215, %v217
        %v219 = vrot.slane %v205, %v218
        %v220 = vcombine.low %v196, %v212
        %v221 = vcombine.high %v196, %v212
        %v223 = vunpack.c.l.s4 1934713408
        %v224 = vunpack.c.0.s8 %v223
        %v225 = vlaneseq
        %v226 = vshrl.u32 %v225, 7
        %v227 = vsub.s32 %v224, %v226
        %v228 = vrot.slane %v220, %v227
        %v230 = vunpack.c.l.s4 1934713408
        %v231 = vunpack.c.0.s8 %v230
        %v232 = vlaneseq
        %v233 = vshrl.u32 %v232, 7
        %v234 = vsub.s32 %v231, %v233
        %v235 = vrot.slane %v221, %v234
        %v236 = vcombine.low %v203, %v219
        %v237 = vcombine.high %v203, %v219
        %v239 = vunpack.c.l.s4 1934713408
        %v240 = vunpack.c.0.s8 %v239
        %v241 = vlaneseq
        %v242 = vshrl.u32 %v241, 7
        %v243 = vsub.s32 %v240, %v242
        %v244 = vrot.slane %v236, %v243
        %v246 = vunpack.c.l.s4 1934713408
        %v247 = vunpack.c.0.s8 %v246
        %v248 = vlaneseq
        %v249 = vshrl.u32 %v248, 7
        %v250 = vsub.s32 %v247, %v249
        %v251 = vrot.slane %v237, %v250
        %v252 = vcombine.high %v228, 0.0
        %v253 = vcombine.high %v235, 0.0
        %v254 = vcombine.high %v244, 0.0
        %v255 = vcombine.high %v251, 0.0
        %v256 = vcombine.low %v181, %v185
        %v257 = vcombine.high %v181, %v185
        %v259 = vunpack.c.l.s4 1983009808
        %v260 = vunpack.c.0.s8 %v259
        %v261 = vlaneseq
        %v262 = vshrl.u32 %v261, 7
        %v263 = vsub.s32 %v260, %v262
        %v264 = vrot.slane %v256, %v263
        %v266 = vunpack.c.l.s4 1983009808
        %v267 = vunpack.c.0.s8 %v266
        %v268 = vlaneseq
        %v269 = vshrl.u32 %v268, 7
        %v270 = vsub.s32 %v267, %v269
        %v271 = vrot.slane %v257, %v270
        %v272 = vcombine.low %v183, %v187
        %v273 = vcombine.high %v183, %v187
        %v275 = vunpack.c.l.s4 1983009808
        %v276 = vunpack.c.0.s8 %v275
        %v277 = vlaneseq
        %v278 = vshrl.u32 %v277, 7
        %v279 = vsub.s32 %v276, %v278
        %v280 = vrot.slane %v272, %v279
        %v282 = vunpack.c.l.s4 1983009808
        %v283 = vunpack.c.0.s8 %v282
        %v284 = vlaneseq
        %v285 = vshrl.u32 %v284, 7
        %v286 = vsub.s32 %v283, %v285
        %v287 = vrot.slane %v273, %v286
        %v288 = vcombine.low %v264, %v280
        %v289 = vcombine.high %v264, %v280
        %v291 = vunpack.c.l.s4 1934713408
        %v292 = vunpack.c.0.s8 %v291
        %v293 = vlaneseq
        %v294 = vshrl.u32 %v293, 7
        %v295 = vsub.s32 %v292, %v294
        %v296 = vrot.slane %v288, %v295
        %v298 = vunpack.c.l.s4 1934713408
        %v299 = vunpack.c.0.s8 %v298
        %v300 = vlaneseq
        %v301 = vshrl.u32 %v300, 7
        %v302 = vsub.s32 %v299, %v301
        %v303 = vrot.slane %v289, %v302
        %v304 = vcombine.low %v271, %v287
        %v305 = vcombine.high %v271, %v287
        %v307 = vunpack.c.l.s4 1934713408
        %v308 = vunpack.c.0.s8 %v307
        %v309 = vlaneseq
        %v310 = vshrl.u32 %v309, 7
        %v311 = vsub.s32 %v308, %v310
        %v312 = vrot.slane %v304, %v311
        %v314 = vunpack.c.l.s4 1934713408
        %v315 = vunpack.c.0.s8 %v314
        %v316 = vlaneseq
        %v317 = vshrl.u32 %v316, 7
        %v318 = vsub.s32 %v315, %v317
        %v319 = vrot.slane %v305, %v318
        %v320 = vcombine.high %v296, 0.0
        %v321 = vcombine.high %v303, 0.0
        %v322 = vcombine.high %v312, 0.0
        %v323 = vcombine.high %v319, 0.0
        %325 = vrot.lane.b32.xlu0 %v252, 16
        %v326 = vpop.permute.xlu0 %325
        %329 = vrot.lane.b32.xlu0 %v235, 32
        %v330 = vpop.permute.xlu0 %329
        %333 = vrot.lane.b32.xlu0 %v253, 48
        %v334 = vpop.permute.xlu0 %333
        %337 = vrot.lane.b32.xlu0 %v244, 64
        %v338 = vpop.permute.xlu0 %337
        %341 = vrot.lane.b32.xlu0 %v254, 80
        %v342 = vpop.permute.xlu0 %341
        %345 = vrot.lane.b32.xlu0 %v251, 96
        %v346 = vpop.permute.xlu0 %345
        %349 = vrot.lane.b32.xlu0 %v255, 112
        %v350 = vpop.permute.xlu0 %349
        %353 = vrot.lane.b32.xlu0 %v320, 16
        %v354 = vpop.permute.xlu0 %353
        %357 = vrot.lane.b32.xlu0 %v303, 32
        %v358 = vpop.permute.xlu0 %357
        %361 = vrot.lane.b32.xlu0 %v321, 48
        %v362 = vpop.permute.xlu0 %361
        %365 = vrot.lane.b32.xlu0 %v312, 64
        %v366 = vpop.permute.xlu0 %365
        %369 = vrot.lane.b32.xlu0 %v322, 80
        %v370 = vpop.permute.xlu0 %369
        %373 = vrot.lane.b32.xlu0 %v319, 96
        %v374 = vpop.permute.xlu0 %373
        %377 = vrot.lane.b32.xlu0 %v323, 112
        %v378 = vpop.permute.xlu0 %377
        %vm380 = vcmask 130048
        %v381 = vsel %vm380, %v228, %v326
        %vm382 = vcmask 261120
        %v383 = vsel %vm382, %v381, %v330
        %vm384 = vcmask 392192
        %v385 = vsel %vm384, %v383, %v334
        %vm386 = vcmask 523264
        %v387 = vsel %vm386, %v385, %v338
        %vm388 = vcmask 654336
        %v389 = vsel %vm388, %v387, %v342
        %vm390 = vcmask 785408
        %v391 = vsel %vm390, %v389, %v346
        %vm392 = vcmask 916480
        %v393 = vsel %vm392, %v391, %v350
        %v394 = vsel %vm380, %v296, %v354
        %v395 = vsel %vm382, %v394, %v358
        %v396 = vsel %vm384, %v395, %v362
        %v397 = vsel %vm386, %v396, %v366
        %v398 = vsel %vm388, %v397, %v370
        %v399 = vsel %vm390, %v398, %v374
        %v400 = vsel %vm392, %v399, %v378
        %401 = vst [vmem:[#allocation2] sm:$0xf] %v393
        %402 = vst [vmem:[#allocation2 + $0x8] sm:$0xf] %v400
        %v403 = vld [vmem:[%s175] sm:$0xff]
        %v404 = vld [vmem:[%s175 + $0x8] sm:$0xff]
        %v405 = vld [vmem:[%s175 + $0x18] sm:$0xff]
        %v406 = vld [vmem:[%s175 + $0x20] sm:$0xff]
        %v407 = vld [vmem:[%s175 + $0x30] sm:$0xff]
        %v408 = vld [vmem:[%s175 + $0x38] sm:$0xff]
        %v409 = vld [vmem:[%s175 + $0x48] sm:$0xff]
        %v410 = vld [vmem:[%s175 + $0x50] sm:$0xff]
        %419 = vrot.lane.b32.xlu0 %v403, 127
        %v420 = vpop.permute.xlu0 %419
        %421 = vrot.lane.b32.xlu0 %v404, 127
        %v422 = vpop.permute.xlu0 %421
        %423 = vrot.lane.b32.xlu0 %v405, 127
        %v424 = vpop.permute.xlu0 %423
        %425 = vrot.lane.b32.xlu0 %v406, 127
        %v426 = vpop.permute.xlu0 %425
        %427 = vrot.lane.b32.xlu0 %v407, 127
        %v428 = vpop.permute.xlu0 %427
        %429 = vrot.lane.b32.xlu0 %v408, 127
        %v430 = vpop.permute.xlu0 %429
        %431 = vrot.lane.b32.xlu0 %v409, 127
        %v432 = vpop.permute.xlu0 %431
        %433 = vrot.lane.b32.xlu0 %v410, 127
        %v434 = vpop.permute.xlu0 %433
        %v443 = vcombine.low %v420, %v428
        %v444 = vcombine.high %v420, %v428
        %v446 = vunpack.c.l.s4 1983009808
        %v447 = vunpack.c.0.s8 %v446
        %v448 = vlaneseq
        %v449 = vshrl.u32 %v448, 7
        %v450 = vsub.s32 %v447, %v449
        %v451 = vrot.slane %v443, %v450
        %v453 = vunpack.c.l.s4 1983009808
        %v454 = vunpack.c.0.s8 %v453
        %v455 = vlaneseq
        %v456 = vshrl.u32 %v455, 7
        %v457 = vsub.s32 %v454, %v456
        %v458 = vrot.slane %v444, %v457
        %v459 = vcombine.low %v424, %v432
        %v460 = vcombine.high %v424, %v432
        %v462 = vunpack.c.l.s4 1983009808
        %v463 = vunpack.c.0.s8 %v462
        %v464 = vlaneseq
        %v465 = vshrl.u32 %v464, 7
        %v466 = vsub.s32 %v463, %v465
        %v467 = vrot.slane %v459, %v466
        %v469 = vunpack.c.l.s4 1983009808
        %v470 = vunpack.c.0.s8 %v469
        %v471 = vlaneseq
        %v472 = vshrl.u32 %v471, 7
        %v473 = vsub.s32 %v470, %v472
        %v474 = vrot.slane %v460, %v473
        %v475 = vcombine.low %v451, %v467
        %v476 = vcombine.high %v451, %v467
        %v478 = vunpack.c.l.s4 1934713408
        %v479 = vunpack.c.0.s8 %v478
        %v480 = vlaneseq
        %v481 = vshrl.u32 %v480, 7
        %v482 = vsub.s32 %v479, %v481
        %v483 = vrot.slane %v475, %v482
        %v485 = vunpack.c.l.s4 1934713408
        %v486 = vunpack.c.0.s8 %v485
        %v487 = vlaneseq
        %v488 = vshrl.u32 %v487, 7
        %v489 = vsub.s32 %v486, %v488
        %v490 = vrot.slane %v476, %v489
        %v491 = vcombine.low %v458, %v474
        %v492 = vcombine.high %v458, %v474
        %v494 = vunpack.c.l.s4 1934713408
        %v495 = vunpack.c.0.s8 %v494
        %v496 = vlaneseq
        %v497 = vshrl.u32 %v496, 7
        %v498 = vsub.s32 %v495, %v497
        %v499 = vrot.slane %v491, %v498
        %v501 = vunpack.c.l.s4 1934713408
        %v502 = vunpack.c.0.s8 %v501
        %v503 = vlaneseq
        %v504 = vshrl.u32 %v503, 7
        %v505 = vsub.s32 %v502, %v504
        %v506 = vrot.slane %v492, %v505
        %v507 = vcombine.high %v483, 0.0
        %v508 = vcombine.high %v490, 0.0
        %v509 = vcombine.high %v499, 0.0
        %v510 = vcombine.high %v506, 0.0
        %v511 = vcombine.low %v422, %v430
        %v512 = vcombine.high %v422, %v430
        %v514 = vunpack.c.l.s4 1983009808
        %v515 = vunpack.c.0.s8 %v514
        %v516 = vlaneseq
        %v517 = vshrl.u32 %v516, 7
        %v518 = vsub.s32 %v515, %v517
        %v519 = vrot.slane %v511, %v518
        %v521 = vunpack.c.l.s4 1983009808
        %v522 = vunpack.c.0.s8 %v521
        %v523 = vlaneseq
        %v524 = vshrl.u32 %v523, 7
        %v525 = vsub.s32 %v522, %v524
        %v526 = vrot.slane %v512, %v525
        %v527 = vcombine.low %v426, %v434
        %v528 = vcombine.high %v426, %v434
        %v530 = vunpack.c.l.s4 1983009808
        %v531 = vunpack.c.0.s8 %v530
        %v532 = vlaneseq
        %v533 = vshrl.u32 %v532, 7
        %v534 = vsub.s32 %v531, %v533
        %v535 = vrot.slane %v527, %v534
        %v537 = vunpack.c.l.s4 1983009808
        %v538 = vunpack.c.0.s8 %v537
        %v539 = vlaneseq
        %v540 = vshrl.u32 %v539, 7
        %v541 = vsub.s32 %v538, %v540
        %v542 = vrot.slane %v528, %v541
        %v543 = vcombine.low %v519, %v535
        %v544 = vcombine.high %v519, %v535
        %v546 = vunpack.c.l.s4 1934713408
        %v547 = vunpack.c.0.s8 %v546
        %v548 = vlaneseq
        %v549 = vshrl.u32 %v548, 7
        %v550 = vsub.s32 %v547, %v549
        %v551 = vrot.slane %v543, %v550
        %v553 = vunpack.c.l.s4 1934713408
        %v554 = vunpack.c.0.s8 %v553
        %v555 = vlaneseq
        %v556 = vshrl.u32 %v555, 7
        %v557 = vsub.s32 %v554, %v556
        %v558 = vrot.slane %v544, %v557
        %v559 = vcombine.low %v526, %v542
        %v560 = vcombine.high %v526, %v542
        %v562 = vunpack.c.l.s4 1934713408
        %v563 = vunpack.c.0.s8 %v562
        %v564 = vlaneseq
        %v565 = vshrl.u32 %v564, 7
        %v566 = vsub.s32 %v563, %v565
        %v567 = vrot.slane %v559, %v566
        %v569 = vunpack.c.l.s4 1934713408
        %v570 = vunpack.c.0.s8 %v569
        %v571 = vlaneseq
        %v572 = vshrl.u32 %v571, 7
        %v573 = vsub.s32 %v570, %v572
        %v574 = vrot.slane %v560, %v573
        %v575 = vcombine.high %v551, 0.0
        %v576 = vcombine.high %v558, 0.0
        %v577 = vcombine.high %v567, 0.0
        %v578 = vcombine.high %v574, 0.0
        %580 = vrot.lane.b32.xlu0 %v507, 16
        %v581 = vpop.permute.xlu0 %580
        %584 = vrot.lane.b32.xlu0 %v490, 32
        %v585 = vpop.permute.xlu0 %584
        %588 = vrot.lane.b32.xlu0 %v508, 48
        %v589 = vpop.permute.xlu0 %588
        %592 = vrot.lane.b32.xlu0 %v499, 64
        %v593 = vpop.permute.xlu0 %592
        %596 = vrot.lane.b32.xlu0 %v509, 80
        %v597 = vpop.permute.xlu0 %596
        %600 = vrot.lane.b32.xlu0 %v506, 96
        %v601 = vpop.permute.xlu0 %600
        %604 = vrot.lane.b32.xlu0 %v510, 112
        %v605 = vpop.permute.xlu0 %604
        %608 = vrot.lane.b32.xlu0 %v575, 16
        %v609 = vpop.permute.xlu0 %608
        %612 = vrot.lane.b32.xlu0 %v558, 32
        %v613 = vpop.permute.xlu0 %612
        %616 = vrot.lane.b32.xlu0 %v576, 48
        %v617 = vpop.permute.xlu0 %616
        %620 = vrot.lane.b32.xlu0 %v567, 64
        %v621 = vpop.permute.xlu0 %620
        %624 = vrot.lane.b32.xlu0 %v577, 80
        %v625 = vpop.permute.xlu0 %624
        %628 = vrot.lane.b32.xlu0 %v574, 96
        %v629 = vpop.permute.xlu0 %628
        %632 = vrot.lane.b32.xlu0 %v578, 112
        %v633 = vpop.permute.xlu0 %632
        %v635 = vsel %vm380, %v483, %v581
        %v636 = vsel %vm382, %v635, %v585
        %v637 = vsel %vm384, %v636, %v589
        %v638 = vsel %vm386, %v637, %v593
        %v639 = vsel %vm388, %v638, %v597
        %v640 = vsel %vm390, %v639, %v601
        %v641 = vsel %vm392, %v640, %v605
        %v642 = vsel %vm380, %v551, %v609
        %v643 = vsel %vm382, %v642, %v613
        %v644 = vsel %vm384, %v643, %v617
        %v645 = vsel %vm386, %v644, %v621
        %v646 = vsel %vm388, %v645, %v625
        %v647 = vsel %vm390, %v646, %v629
        %v648 = vsel %vm392, %v647, %v633
        %v651 = vrot.slane %v641, 4
        %v652 = vrot.slane %v648, 4
        %655 = vst [vmem:[#allocation2] sm:$0xf0] %v651
        %656 = vst [vmem:[#allocation2 + $0x8] sm:$0xf0] %v652
        %v657 = vld [vmem:[%s175] sm:$0xff]
        %v658 = vld [vmem:[%s175 + $0x8] sm:$0xff]
        %v659 = vld [vmem:[%s175 + $0x18] sm:$0xff]
        %v660 = vld [vmem:[%s175 + $0x20] sm:$0xff]
        %v661 = vld [vmem:[%s175 + $0x30] sm:$0xff]
        %v662 = vld [vmem:[%s175 + $0x38] sm:$0xff]
        %v663 = vld [vmem:[%s175 + $0x48] sm:$0xff]
        %v664 = vld [vmem:[%s175 + $0x50] sm:$0xff]
        %673 = vrot.lane.b32.xlu0 %v657, 126
        %v674 = vpop.permute.xlu0 %673
        %675 = vrot.lane.b32.xlu0 %v658, 126
        %v676 = vpop.permute.xlu0 %675
        %677 = vrot.lane.b32.xlu0 %v659, 126
        %v678 = vpop.permute.xlu0 %677
        %679 = vrot.lane.b32.xlu0 %v660, 126
        %v680 = vpop.permute.xlu0 %679
        %681 = vrot.lane.b32.xlu0 %v661, 126
        %v682 = vpop.permute.xlu0 %681
        %683 = vrot.lane.b32.xlu0 %v662, 126
        %v684 = vpop.permute.xlu0 %683
        %685 = vrot.lane.b32.xlu0 %v663, 126
        %v686 = vpop.permute.xlu0 %685
        %687 = vrot.lane.b32.xlu0 %v664, 126
        %v688 = vpop.permute.xlu0 %687
        %v697 = vcombine.low %v674, %v682
        %v698 = vcombine.high %v674, %v682
        %v700 = vunpack.c.l.s4 1983009808
        %v701 = vunpack.c.0.s8 %v700
        %v702 = vlaneseq
        %v703 = vshrl.u32 %v702, 7
        %v704 = vsub.s32 %v701, %v703
        %v705 = vrot.slane %v697, %v704
        %v707 = vunpack.c.l.s4 1983009808
        %v708 = vunpack.c.0.s8 %v707
        %v709 = vlaneseq
        %v710 = vshrl.u32 %v709, 7
        %v711 = vsub.s32 %v708, %v710
        %v712 = vrot.slane %v698, %v711
        %v713 = vcombine.low %v678, %v686
        %v714 = vcombine.high %v678, %v686
        %v716 = vunpack.c.l.s4 1983009808
        %v717 = vunpack.c.0.s8 %v716
        %v718 = vlaneseq
        %v719 = vshrl.u32 %v718, 7
        %v720 = vsub.s32 %v717, %v719
        %v721 = vrot.slane %v713, %v720
        %v723 = vunpack.c.l.s4 1983009808
        %v724 = vunpack.c.0.s8 %v723
        %v725 = vlaneseq
        %v726 = vshrl.u32 %v725, 7
        %v727 = vsub.s32 %v724, %v726
        %v728 = vrot.slane %v714, %v727
        %v729 = vcombine.low %v705, %v721
        %v730 = vcombine.high %v705, %v721
        %v732 = vunpack.c.l.s4 1934713408
        %v733 = vunpack.c.0.s8 %v732
        %v734 = vlaneseq
        %v735 = vshrl.u32 %v734, 7
        %v736 = vsub.s32 %v733, %v735
        %v737 = vrot.slane %v729, %v736
        %v739 = vunpack.c.l.s4 1934713408
        %v740 = vunpack.c.0.s8 %v739
        %v741 = vlaneseq
        %v742 = vshrl.u32 %v741, 7
        %v743 = vsub.s32 %v740, %v742
        %v744 = vrot.slane %v730, %v743
        %v745 = vcombine.low %v712, %v728
        %v746 = vcombine.high %v712, %v728
        %v748 = vunpack.c.l.s4 1934713408
        %v749 = vunpack.c.0.s8 %v748
        %v750 = vlaneseq
        %v751 = vshrl.u32 %v750, 7
        %v752 = vsub.s32 %v749, %v751
        %v753 = vrot.slane %v745, %v752
        %v755 = vunpack.c.l.s4 1934713408
        %v756 = vunpack.c.0.s8 %v755
        %v757 = vlaneseq
        %v758 = vshrl.u32 %v757, 7
        %v759 = vsub.s32 %v756, %v758
        %v760 = vrot.slane %v746, %v759
        %v761 = vcombine.high %v737, 0.0
        %v762 = vcombine.high %v744, 0.0
        %v763 = vcombine.high %v753, 0.0
        %v764 = vcombine.high %v760, 0.0
        %v765 = vcombine.low %v676, %v684
        %v766 = vcombine.high %v676, %v684
        %v768 = vunpack.c.l.s4 1983009808
        %v769 = vunpack.c.0.s8 %v768
        %v770 = vlaneseq
        %v771 = vshrl.u32 %v770, 7
        %v772 = vsub.s32 %v769, %v771
        %v773 = vrot.slane %v765, %v772
        %v775 = vunpack.c.l.s4 1983009808
        %v776 = vunpack.c.0.s8 %v775
        %v777 = vlaneseq
        %v778 = vshrl.u32 %v777, 7
        %v779 = vsub.s32 %v776, %v778
        %v780 = vrot.slane %v766, %v779
        %v781 = vcombine.low %v680, %v688
        %v782 = vcombine.high %v680, %v688
        %v784 = vunpack.c.l.s4 1983009808
        %v785 = vunpack.c.0.s8 %v784
        %v786 = vlaneseq
        %v787 = vshrl.u32 %v786, 7
        %v788 = vsub.s32 %v785, %v787
        %v789 = vrot.slane %v781, %v788
        %v791 = vunpack.c.l.s4 1983009808
        %v792 = vunpack.c.0.s8 %v791
        %v793 = vlaneseq
        %v794 = vshrl.u32 %v793, 7
        %v795 = vsub.s32 %v792, %v794
        %v796 = vrot.slane %v782, %v795
        %v797 = vcombine.low %v773, %v789
        %v798 = vcombine.high %v773, %v789
        %v800 = vunpack.c.l.s4 1934713408
        %v801 = vunpack.c.0.s8 %v800
        %v802 = vlaneseq
        %v803 = vshrl.u32 %v802, 7
        %v804 = vsub.s32 %v801, %v803
        %v805 = vrot.slane %v797, %v804
        %v807 = vunpack.c.l.s4 1934713408
        %v808 = vunpack.c.0.s8 %v807
        %v809 = vlaneseq
        %v810 = vshrl.u32 %v809, 7
        %v811 = vsub.s32 %v808, %v810
        %v812 = vrot.slane %v798, %v811
        %v813 = vcombine.low %v780, %v796
        %v814 = vcombine.high %v780, %v796
        %v816 = vunpack.c.l.s4 1934713408
        %v817 = vunpack.c.0.s8 %v816
        %v818 = vlaneseq
        %v819 = vshrl.u32 %v818, 7
        %v820 = vsub.s32 %v817, %v819
        %v821 = vrot.slane %v813, %v820
        %v823 = vunpack.c.l.s4 1934713408
        %v824 = vunpack.c.0.s8 %v823
        %v825 = vlaneseq
        %v826 = vshrl.u32 %v825, 7
        %v827 = vsub.s32 %v824, %v826
        %v828 = vrot.slane %v814, %v827
        %v829 = vcombine.high %v805, 0.0
        %v830 = vcombine.high %v812, 0.0
        %v831 = vcombine.high %v821, 0.0
        %v832 = vcombine.high %v828, 0.0
        %834 = vrot.lane.b32.xlu0 %v761, 16
        %v835 = vpop.permute.xlu0 %834
        %838 = vrot.lane.b32.xlu0 %v744, 32
        %v839 = vpop.permute.xlu0 %838
        %842 = vrot.lane.b32.xlu0 %v762, 48
        %v843 = vpop.permute.xlu0 %842
        %846 = vrot.lane.b32.xlu0 %v753, 64
        %v847 = vpop.permute.xlu0 %846
        %850 = vrot.lane.b32.xlu0 %v763, 80
        %v851 = vpop.permute.xlu0 %850
        %854 = vrot.lane.b32.xlu0 %v760, 96
        %v855 = vpop.permute.xlu0 %854
        %858 = vrot.lane.b32.xlu0 %v764, 112
        %v859 = vpop.permute.xlu0 %858
        %862 = vrot.lane.b32.xlu0 %v829, 16
        %v863 = vpop.permute.xlu0 %862
        %866 = vrot.lane.b32.xlu0 %v812, 32
        %v867 = vpop.permute.xlu0 %866
        %870 = vrot.lane.b32.xlu0 %v830, 48
        %v871 = vpop.permute.xlu0 %870
        %874 = vrot.lane.b32.xlu0 %v821, 64
        %v875 = vpop.permute.xlu0 %874
        %878 = vrot.lane.b32.xlu0 %v831, 80
        %v879 = vpop.permute.xlu0 %878
        %882 = vrot.lane.b32.xlu0 %v828, 96
        %v883 = vpop.permute.xlu0 %882
        %886 = vrot.lane.b32.xlu0 %v832, 112
        %v887 = vpop.permute.xlu0 %886
        %v889 = vsel %vm380, %v737, %v835
        %v890 = vsel %vm382, %v889, %v839
        %v891 = vsel %vm384, %v890, %v843
        %v892 = vsel %vm386, %v891, %v847
        %v893 = vsel %vm388, %v892, %v851
        %v894 = vsel %vm390, %v893, %v855
        %v895 = vsel %vm392, %v894, %v859
        %v896 = vsel %vm380, %v805, %v863
        %v897 = vsel %vm382, %v896, %v867
        %v898 = vsel %vm384, %v897, %v871
        %v899 = vsel %vm386, %v898, %v875
        %v900 = vsel %vm388, %v899, %v879
        %v901 = vsel %vm390, %v900, %v883
        %v902 = vsel %vm392, %v901, %v887
        %903 = vst [vmem:[#allocation2 + $0x10] sm:$0xf] %v895
        %904 = vst [vmem:[#allocation2 + $0x18] sm:$0xf] %v902
        %v905 = vld [vmem:[%s175 + $0x1] sm:$0xff]
        %v906 = vld [vmem:[%s175 + $0x9] sm:$0xff]
        %v907 = vld [vmem:[%s175 + $0x19] sm:$0xff]
        %v908 = vld [vmem:[%s175 + $0x21] sm:$0xff]
        %v909 = vld [vmem:[%s175 + $0x31] sm:$0xff]
        %v910 = vld [vmem:[%s175 + $0x39] sm:$0xff]
        %v911 = vld [vmem:[%s175 + $0x49] sm:$0xff]
        %v912 = vld [vmem:[%s175 + $0x51] sm:$0xff]
        %v913 = vcombine.low %v905, %v909
        %v914 = vcombine.high %v905, %v909
        %v916 = vunpack.c.l.s4 1983009808
        %v917 = vunpack.c.0.s8 %v916
        %v918 = vlaneseq
        %v919 = vshrl.u32 %v918, 7
        %v920 = vsub.s32 %v917, %v919
        %v921 = vrot.slane %v913, %v920
        %v923 = vunpack.c.l.s4 1983009808
        %v924 = vunpack.c.0.s8 %v923
        %v925 = vlaneseq
        %v926 = vshrl.u32 %v925, 7
        %v927 = vsub.s32 %v924, %v926
        %v928 = vrot.slane %v914, %v927
        %v929 = vcombine.low %v907, %v911
        %v930 = vcombine.high %v907, %v911
        %v932 = vunpack.c.l.s4 1983009808
        %v933 = vunpack.c.0.s8 %v932
        %v934 = vlaneseq
        %v935 = vshrl.u32 %v934, 7
        %v936 = vsub.s32 %v933, %v935
        %v937 = vrot.slane %v929, %v936
        %v939 = vunpack.c.l.s4 1983009808
        %v940 = vunpack.c.0.s8 %v939
        %v941 = vlaneseq
        %v942 = vshrl.u32 %v941, 7
        %v943 = vsub.s32 %v940, %v942
        %v944 = vrot.slane %v930, %v943
        %v945 = vcombine.low %v921, %v937
        %v946 = vcombine.high %v921, %v937
        %v948 = vunpack.c.l.s4 1934713408
        %v949 = vunpack.c.0.s8 %v948
        %v950 = vlaneseq
        %v951 = vshrl.u32 %v950, 7
        %v952 = vsub.s32 %v949, %v951
        %v953 = vrot.slane %v945, %v952
        %v955 = vunpack.c.l.s4 1934713408
        %v956 = vunpack.c.0.s8 %v955
        %v957 = vlaneseq
        %v958 = vshrl.u32 %v957, 7
        %v959 = vsub.s32 %v956, %v958
        %v960 = vrot.slane %v946, %v959
        %v961 = vcombine.low %v928, %v944
        %v962 = vcombine.high %v928, %v944
        %v964 = vunpack.c.l.s4 1934713408
        %v965 = vunpack.c.0.s8 %v964
        %v966 = vlaneseq
        %v967 = vshrl.u32 %v966, 7
        %v968 = vsub.s32 %v965, %v967
        %v969 = vrot.slane %v961, %v968
        %v971 = vunpack.c.l.s4 1934713408
        %v972 = vunpack.c.0.s8 %v971
        %v973 = vlaneseq
        %v974 = vshrl.u32 %v973, 7
        %v975 = vsub.s32 %v972, %v974
        %v976 = vrot.slane %v962, %v975
        %v977 = vcombine.high %v953, 0.0
        %v978 = vcombine.high %v960, 0.0
        %v979 = vcombine.high %v969, 0.0
        %v980 = vcombine.high %v976, 0.0
        %v981 = vcombine.low %v906, %v910
        %v982 = vcombine.high %v906, %v910
        %v984 = vunpack.c.l.s4 1983009808
        %v985 = vunpack.c.0.s8 %v984
        %v986 = vlaneseq
        %v987 = vshrl.u32 %v986, 7
        %v988 = vsub.s32 %v985, %v987
        %v989 = vrot.slane %v981, %v988
        %v991 = vunpack.c.l.s4 1983009808
        %v992 = vunpack.c.0.s8 %v991
        %v993 = vlaneseq
        %v994 = vshrl.u32 %v993, 7
        %v995 = vsub.s32 %v992, %v994
        %v996 = vrot.slane %v982, %v995
        %v997 = vcombine.low %v908, %v912
        %v998 = vcombine.high %v908, %v912
        %v1000 = vunpack.c.l.s4 1983009808
        %v1001 = vunpack.c.0.s8 %v1000
        %v1002 = vlaneseq
        %v1003 = vshrl.u32 %v1002, 7
        %v1004 = vsub.s32 %v1001, %v1003
        %v1005 = vrot.slane %v997, %v1004
        %v1007 = vunpack.c.l.s4 1983009808
        %v1008 = vunpack.c.0.s8 %v1007
        %v1009 = vlaneseq
        %v1010 = vshrl.u32 %v1009, 7
        %v1011 = vsub.s32 %v1008, %v1010
        %v1012 = vrot.slane %v998, %v1011
        %v1013 = vcombine.low %v989, %v1005
        %v1014 = vcombine.high %v989, %v1005
        %v1016 = vunpack.c.l.s4 1934713408
        %v1017 = vunpack.c.0.s8 %v1016
        %v1018 = vlaneseq
        %v1019 = vshrl.u32 %v1018, 7
        %v1020 = vsub.s32 %v1017, %v1019
        %v1021 = vrot.slane %v1013, %v1020
        %v1023 = vunpack.c.l.s4 1934713408
        %v1024 = vunpack.c.0.s8 %v1023
        %v1025 = vlaneseq
        %v1026 = vshrl.u32 %v1025, 7
        %v1027 = vsub.s32 %v1024, %v1026
        %v1028 = vrot.slane %v1014, %v1027
        %v1029 = vcombine.low %v996, %v1012
        %v1030 = vcombine.high %v996, %v1012
        %v1032 = vunpack.c.l.s4 1934713408
        %v1033 = vunpack.c.0.s8 %v1032
        %v1034 = vlaneseq
        %v1035 = vshrl.u32 %v1034, 7
        %v1036 = vsub.s32 %v1033, %v1035
        %v1037 = vrot.slane %v1029, %v1036
        %v1039 = vunpack.c.l.s4 1934713408
        %v1040 = vunpack.c.0.s8 %v1039
        %v1041 = vlaneseq
        %v1042 = vshrl.u32 %v1041, 7
        %v1043 = vsub.s32 %v1040, %v1042
        %v1044 = vrot.slane %v1030, %v1043
        %v1045 = vcombine.high %v1021, 0.0
        %v1046 = vcombine.high %v1028, 0.0
        %v1047 = vcombine.high %v1037, 0.0
        %v1048 = vcombine.high %v1044, 0.0
        %1050 = vrot.lane.b32.xlu0 %v977, 16
        %v1051 = vpop.permute.xlu0 %1050
        %1054 = vrot.lane.b32.xlu0 %v960, 32
        %v1055 = vpop.permute.xlu0 %1054
        %1058 = vrot.lane.b32.xlu0 %v978, 48
        %v1059 = vpop.permute.xlu0 %1058
        %1062 = vrot.lane.b32.xlu0 %v969, 64
        %v1063 = vpop.permute.xlu0 %1062
        %1066 = vrot.lane.b32.xlu0 %v979, 80
        %v1067 = vpop.permute.xlu0 %1066
        %1070 = vrot.lane.b32.xlu0 %v976, 96
        %v1071 = vpop.permute.xlu0 %1070
        %1074 = vrot.lane.b32.xlu0 %v980, 112
        %v1075 = vpop.permute.xlu0 %1074
        %1078 = vrot.lane.b32.xlu0 %v1045, 16
        %v1079 = vpop.permute.xlu0 %1078
        %1082 = vrot.lane.b32.xlu0 %v1028, 32
        %v1083 = vpop.permute.xlu0 %1082
        %1086 = vrot.lane.b32.xlu0 %v1046, 48
        %v1087 = vpop.permute.xlu0 %1086
        %1090 = vrot.lane.b32.xlu0 %v1037, 64
        %v1091 = vpop.permute.xlu0 %1090
        %1094 = vrot.lane.b32.xlu0 %v1047, 80
        %v1095 = vpop.permute.xlu0 %1094
        %1098 = vrot.lane.b32.xlu0 %v1044, 96
        %v1099 = vpop.permute.xlu0 %1098
        %1102 = vrot.lane.b32.xlu0 %v1048, 112
        %v1103 = vpop.permute.xlu0 %1102
        %v1105 = vsel %vm380, %v953, %v1051
        %v1106 = vsel %vm382, %v1105, %v1055
        %v1107 = vsel %vm384, %v1106, %v1059
        %v1108 = vsel %vm386, %v1107, %v1063
        %v1109 = vsel %vm388, %v1108, %v1067
        %v1110 = vsel %vm390, %v1109, %v1071
        %v1111 = vsel %vm392, %v1110, %v1075
        %v1112 = vsel %vm380, %v1021, %v1079
        %v1113 = vsel %vm382, %v1112, %v1083
        %v1114 = vsel %vm384, %v1113, %v1087
        %v1115 = vsel %vm386, %v1114, %v1091
        %v1116 = vsel %vm388, %v1115, %v1095
        %v1117 = vsel %vm390, %v1116, %v1099
        %v1118 = vsel %vm392, %v1117, %v1103
        %v1121 = vrot.slane %v1111, 4
        %v1122 = vrot.slane %v1118, 4
        %1125 = vst [vmem:[#allocation2 + $0x10] sm:$0xf0] %v1121
        %1126 = vst [vmem:[#allocation2 + $0x18] sm:$0xf0] %v1122
        %v1127 = vld [vmem:[%s175 + $0x1] sm:$0xff]
        %v1128 = vld [vmem:[%s175 + $0x9] sm:$0xff]
        %v1129 = vld [vmem:[%s175 + $0x19] sm:$0xff]
        %v1130 = vld [vmem:[%s175 + $0x21] sm:$0xff]
        %v1131 = vld [vmem:[%s175 + $0x31] sm:$0xff]
        %v1132 = vld [vmem:[%s175 + $0x39] sm:$0xff]
        %v1133 = vld [vmem:[%s175 + $0x49] sm:$0xff]
        %v1134 = vld [vmem:[%s175 + $0x51] sm:$0xff]
        %1143 = vrot.lane.b32.xlu0 %v1127, 127
        %v1144 = vpop.permute.xlu0 %1143
        %1145 = vrot.lane.b32.xlu0 %v1128, 127
        %v1146 = vpop.permute.xlu0 %1145
        %1147 = vrot.lane.b32.xlu0 %v1129, 127
        %v1148 = vpop.permute.xlu0 %1147
        %1149 = vrot.lane.b32.xlu0 %v1130, 127
        %v1150 = vpop.permute.xlu0 %1149
        %1151 = vrot.lane.b32.xlu0 %v1131, 127
        %v1152 = vpop.permute.xlu0 %1151
        %1153 = vrot.lane.b32.xlu0 %v1132, 127
        %v1154 = vpop.permute.xlu0 %1153
        %1155 = vrot.lane.b32.xlu0 %v1133, 127
        %v1156 = vpop.permute.xlu0 %1155
        %1157 = vrot.lane.b32.xlu0 %v1134, 127
        %v1158 = vpop.permute.xlu0 %1157
        %v1167 = vcombine.low %v1144, %v1152
        %v1168 = vcombine.high %v1144, %v1152
        %v1170 = vunpack.c.l.s4 1983009808
        %v1171 = vunpack.c.0.s8 %v1170
        %v1172 = vlaneseq
        %v1173 = vshrl.u32 %v1172, 7
        %v1174 = vsub.s32 %v1171, %v1173
        %v1175 = vrot.slane %v1167, %v1174
        %v1177 = vunpack.c.l.s4 1983009808
        %v1178 = vunpack.c.0.s8 %v1177
        %v1179 = vlaneseq
        %v1180 = vshrl.u32 %v1179, 7
        %v1181 = vsub.s32 %v1178, %v1180
        %v1182 = vrot.slane %v1168, %v1181
        %v1183 = vcombine.low %v1148, %v1156
        %v1184 = vcombine.high %v1148, %v1156
        %v1186 = vunpack.c.l.s4 1983009808
        %v1187 = vunpack.c.0.s8 %v1186
        %v1188 = vlaneseq
        %v1189 = vshrl.u32 %v1188, 7
        %v1190 = vsub.s32 %v1187, %v1189
        %v1191 = vrot.slane %v1183, %v1190
        %v1193 = vunpack.c.l.s4 1983009808
        %v1194 = vunpack.c.0.s8 %v1193
        %v1195 = vlaneseq
        %v1196 = vshrl.u32 %v1195, 7
        %v1197 = vsub.s32 %v1194, %v1196
        %v1198 = vrot.slane %v1184, %v1197
        %v1199 = vcombine.low %v1175, %v1191
        %v1200 = vcombine.high %v1175, %v1191
        %v1202 = vunpack.c.l.s4 1934713408
        %v1203 = vunpack.c.0.s8 %v1202
        %v1204 = vlaneseq
        %v1205 = vshrl.u32 %v1204, 7
        %v1206 = vsub.s32 %v1203, %v1205
        %v1207 = vrot.slane %v1199, %v1206
        %v1209 = vunpack.c.l.s4 1934713408
        %v1210 = vunpack.c.0.s8 %v1209
        %v1211 = vlaneseq
        %v1212 = vshrl.u32 %v1211, 7
        %v1213 = vsub.s32 %v1210, %v1212
        %v1214 = vrot.slane %v1200, %v1213
        %v1215 = vcombine.low %v1182, %v1198
        %v1216 = vcombine.high %v1182, %v1198
        %v1218 = vunpack.c.l.s4 1934713408
        %v1219 = vunpack.c.0.s8 %v1218
        %v1220 = vlaneseq
        %v1221 = vshrl.u32 %v1220, 7
        %v1222 = vsub.s32 %v1219, %v1221
        %v1223 = vrot.slane %v1215, %v1222
        %v1225 = vunpack.c.l.s4 1934713408
        %v1226 = vunpack.c.0.s8 %v1225
        %v1227 = vlaneseq
        %v1228 = vshrl.u32 %v1227, 7
        %v1229 = vsub.s32 %v1226, %v1228
        %v1230 = vrot.slane %v1216, %v1229
        %v1231 = vcombine.high %v1207, 0.0
        %v1232 = vcombine.high %v1214, 0.0
        %v1233 = vcombine.high %v1223, 0.0
        %v1234 = vcombine.high %v1230, 0.0
        %v1235 = vcombine.low %v1146, %v1154
        %v1236 = vcombine.high %v1146, %v1154
        %v1238 = vunpack.c.l.s4 1983009808
        %v1239 = vunpack.c.0.s8 %v1238
        %v1240 = vlaneseq
        %v1241 = vshrl.u32 %v1240, 7
        %v1242 = vsub.s32 %v1239, %v1241
        %v1243 = vrot.slane %v1235, %v1242
        %v1245 = vunpack.c.l.s4 1983009808
        %v1246 = vunpack.c.0.s8 %v1245
        %v1247 = vlaneseq
        %v1248 = vshrl.u32 %v1247, 7
        %v1249 = vsub.s32 %v1246, %v1248
        %v1250 = vrot.slane %v1236, %v1249
        %v1251 = vcombine.low %v1150, %v1158
        %v1252 = vcombine.high %v1150, %v1158
        %v1254 = vunpack.c.l.s4 1983009808
        %v1255 = vunpack.c.0.s8 %v1254
        %v1256 = vlaneseq
        %v1257 = vshrl.u32 %v1256, 7
        %v1258 = vsub.s32 %v1255, %v1257
        %v1259 = vrot.slane %v1251, %v1258
        %v1261 = vunpack.c.l.s4 1983009808
        %v1262 = vunpack.c.0.s8 %v1261
        %v1263 = vlaneseq
        %v1264 = vshrl.u32 %v1263, 7
        %v1265 = vsub.s32 %v1262, %v1264
        %v1266 = vrot.slane %v1252, %v1265
        %v1267 = vcombine.low %v1243, %v1259
        %v1268 = vcombine.high %v1243, %v1259
        %v1270 = vunpack.c.l.s4 1934713408
        %v1271 = vunpack.c.0.s8 %v1270
        %v1272 = vlaneseq
        %v1273 = vshrl.u32 %v1272, 7
        %v1274 = vsub.s32 %v1271, %v1273
        %v1275 = vrot.slane %v1267, %v1274
        %v1277 = vunpack.c.l.s4 1934713408
        %v1278 = vunpack.c.0.s8 %v1277
        %v1279 = vlaneseq
        %v1280 = vshrl.u32 %v1279, 7
        %v1281 = vsub.s32 %v1278, %v1280
        %v1282 = vrot.slane %v1268, %v1281
        %v1283 = vcombine.low %v1250, %v1266
        %v1284 = vcombine.high %v1250, %v1266
        %v1286 = vunpack.c.l.s4 1934713408
        %v1287 = vunpack.c.0.s8 %v1286
        %v1288 = vlaneseq
        %v1289 = vshrl.u32 %v1288, 7
        %v1290 = vsub.s32 %v1287, %v1289
        %v1291 = vrot.slane %v1283, %v1290
        %v1293 = vunpack.c.l.s4 1934713408
        %v1294 = vunpack.c.0.s8 %v1293
        %v1295 = vlaneseq
        %v1296 = vshrl.u32 %v1295, 7
        %v1297 = vsub.s32 %v1294, %v1296
        %v1298 = vrot.slane %v1284, %v1297
        %v1299 = vcombine.high %v1275, 0.0
        %v1300 = vcombine.high %v1282, 0.0
        %v1301 = vcombine.high %v1291, 0.0
        %v1302 = vcombine.high %v1298, 0.0
        %1304 = vrot.lane.b32.xlu0 %v1231, 16
        %v1305 = vpop.permute.xlu0 %1304
        %1308 = vrot.lane.b32.xlu0 %v1214, 32
        %v1309 = vpop.permute.xlu0 %1308
        %1312 = vrot.lane.b32.xlu0 %v1232, 48
        %v1313 = vpop.permute.xlu0 %1312
        %1316 = vrot.lane.b32.xlu0 %v1223, 64
        %v1317 = vpop.permute.xlu0 %1316
        %1320 = vrot.lane.b32.xlu0 %v1233, 80
        %v1321 = vpop.permute.xlu0 %1320
        %1324 = vrot.lane.b32.xlu0 %v1230, 96
        %v1325 = vpop.permute.xlu0 %1324
        %1328 = vrot.lane.b32.xlu0 %v1234, 112
        %v1329 = vpop.permute.xlu0 %1328
        %1332 = vrot.lane.b32.xlu0 %v1299, 16
        %v1333 = vpop.permute.xlu0 %1332
        %1336 = vrot.lane.b32.xlu0 %v1282, 32
        %v1337 = vpop.permute.xlu0 %1336
        %1340 = vrot.lane.b32.xlu0 %v1300, 48
        %v1341 = vpop.permute.xlu0 %1340
        %1344 = vrot.lane.b32.xlu0 %v1291, 64
        %v1345 = vpop.permute.xlu0 %1344
        %1348 = vrot.lane.b32.xlu0 %v1301, 80
        %v1349 = vpop.permute.xlu0 %1348
        %1352 = vrot.lane.b32.xlu0 %v1298, 96
        %v1353 = vpop.permute.xlu0 %1352
        %1356 = vrot.lane.b32.xlu0 %v1302, 112
        %v1357 = vpop.permute.xlu0 %1356
        %v1359 = vsel %vm380, %v1207, %v1305
        %v1360 = vsel %vm382, %v1359, %v1309
        %v1361 = vsel %vm384, %v1360, %v1313
        %v1362 = vsel %vm386, %v1361, %v1317
        %v1363 = vsel %vm388, %v1362, %v1321
        %v1364 = vsel %vm390, %v1363, %v1325
        %v1365 = vsel %vm392, %v1364, %v1329
        %v1366 = vsel %vm380, %v1275, %v1333
        %v1367 = vsel %vm382, %v1366, %v1337
        %v1368 = vsel %vm384, %v1367, %v1341
        %v1369 = vsel %vm386, %v1368, %v1345
        %v1370 = vsel %vm388, %v1369, %v1349
        %v1371 = vsel %vm390, %v1370, %v1353
        %v1372 = vsel %vm392, %v1371, %v1357
        %1373 = vst [vmem:[#allocation2 + $0x20] sm:$0xf] %v1365
        %1374 = vst [vmem:[#allocation2 + $0x28] sm:$0xf] %v1372
        %v1375 = vld [vmem:[%s175 + $0x1] sm:$0xff]
        %v1376 = vld [vmem:[%s175 + $0x9] sm:$0xff]
        %v1377 = vld [vmem:[%s175 + $0x19] sm:$0xff]
        %v1378 = vld [vmem:[%s175 + $0x21] sm:$0xff]
        %v1379 = vld [vmem:[%s175 + $0x31] sm:$0xff]
        %v1380 = vld [vmem:[%s175 + $0x39] sm:$0xff]
        %v1381 = vld [vmem:[%s175 + $0x49] sm:$0xff]
        %v1382 = vld [vmem:[%s175 + $0x51] sm:$0xff]
        %1391 = vrot.lane.b32.xlu0 %v1375, 126
        %v1392 = vpop.permute.xlu0 %1391
        %1393 = vrot.lane.b32.xlu0 %v1376, 126
        %v1394 = vpop.permute.xlu0 %1393
        %1395 = vrot.lane.b32.xlu0 %v1377, 126
        %v1396 = vpop.permute.xlu0 %1395
        %1397 = vrot.lane.b32.xlu0 %v1378, 126
        %v1398 = vpop.permute.xlu0 %1397
        %1399 = vrot.lane.b32.xlu0 %v1379, 126
        %v1400 = vpop.permute.xlu0 %1399
        %1401 = vrot.lane.b32.xlu0 %v1380, 126
        %v1402 = vpop.permute.xlu0 %1401
        %1403 = vrot.lane.b32.xlu0 %v1381, 126
        %v1404 = vpop.permute.xlu0 %1403
        %1405 = vrot.lane.b32.xlu0 %v1382, 126
        %v1406 = vpop.permute.xlu0 %1405
        %v1415 = vcombine.low %v1392, %v1400
        %v1416 = vcombine.high %v1392, %v1400
        %v1418 = vunpack.c.l.s4 1983009808
        %v1419 = vunpack.c.0.s8 %v1418
        %v1420 = vlaneseq
        %v1421 = vshrl.u32 %v1420, 7
        %v1422 = vsub.s32 %v1419, %v1421
        %v1423 = vrot.slane %v1415, %v1422
        %v1425 = vunpack.c.l.s4 1983009808
        %v1426 = vunpack.c.0.s8 %v1425
        %v1427 = vlaneseq
        %v1428 = vshrl.u32 %v1427, 7
        %v1429 = vsub.s32 %v1426, %v1428
        %v1430 = vrot.slane %v1416, %v1429
        %v1431 = vcombine.low %v1396, %v1404
        %v1432 = vcombine.high %v1396, %v1404
        %v1434 = vunpack.c.l.s4 1983009808
        %v1435 = vunpack.c.0.s8 %v1434
        %v1436 = vlaneseq
        %v1437 = vshrl.u32 %v1436, 7
        %v1438 = vsub.s32 %v1435, %v1437
        %v1439 = vrot.slane %v1431, %v1438
        %v1441 = vunpack.c.l.s4 1983009808
        %v1442 = vunpack.c.0.s8 %v1441
        %v1443 = vlaneseq
        %v1444 = vshrl.u32 %v1443, 7
        %v1445 = vsub.s32 %v1442, %v1444
        %v1446 = vrot.slane %v1432, %v1445
        %v1447 = vcombine.low %v1423, %v1439
        %v1448 = vcombine.high %v1423, %v1439
        %v1450 = vunpack.c.l.s4 1934713408
        %v1451 = vunpack.c.0.s8 %v1450
        %v1452 = vlaneseq
        %v1453 = vshrl.u32 %v1452, 7
        %v1454 = vsub.s32 %v1451, %v1453
        %v1455 = vrot.slane %v1447, %v1454
        %v1457 = vunpack.c.l.s4 1934713408
        %v1458 = vunpack.c.0.s8 %v1457
        %v1459 = vlaneseq
        %v1460 = vshrl.u32 %v1459, 7
        %v1461 = vsub.s32 %v1458, %v1460
        %v1462 = vrot.slane %v1448, %v1461
        %v1463 = vcombine.low %v1430, %v1446
        %v1464 = vcombine.high %v1430, %v1446
        %v1466 = vunpack.c.l.s4 1934713408
        %v1467 = vunpack.c.0.s8 %v1466
        %v1468 = vlaneseq
        %v1469 = vshrl.u32 %v1468, 7
        %v1470 = vsub.s32 %v1467, %v1469
        %v1471 = vrot.slane %v1463, %v1470
        %v1473 = vunpack.c.l.s4 1934713408
        %v1474 = vunpack.c.0.s8 %v1473
        %v1475 = vlaneseq
        %v1476 = vshrl.u32 %v1475, 7
        %v1477 = vsub.s32 %v1474, %v1476
        %v1478 = vrot.slane %v1464, %v1477
        %v1479 = vcombine.high %v1455, 0.0
        %v1480 = vcombine.high %v1462, 0.0
        %v1481 = vcombine.high %v1471, 0.0
        %v1482 = vcombine.high %v1478, 0.0
        %v1483 = vcombine.low %v1394, %v1402
        %v1484 = vcombine.high %v1394, %v1402
        %v1486 = vunpack.c.l.s4 1983009808
        %v1487 = vunpack.c.0.s8 %v1486
        %v1488 = vlaneseq
        %v1489 = vshrl.u32 %v1488, 7
        %v1490 = vsub.s32 %v1487, %v1489
        %v1491 = vrot.slane %v1483, %v1490
        %v1493 = vunpack.c.l.s4 1983009808
        %v1494 = vunpack.c.0.s8 %v1493
        %v1495 = vlaneseq
        %v1496 = vshrl.u32 %v1495, 7
        %v1497 = vsub.s32 %v1494, %v1496
        %v1498 = vrot.slane %v1484, %v1497
        %v1499 = vcombine.low %v1398, %v1406
        %v1500 = vcombine.high %v1398, %v1406
        %v1502 = vunpack.c.l.s4 1983009808
        %v1503 = vunpack.c.0.s8 %v1502
        %v1504 = vlaneseq
        %v1505 = vshrl.u32 %v1504, 7
        %v1506 = vsub.s32 %v1503, %v1505
        %v1507 = vrot.slane %v1499, %v1506
        %v1509 = vunpack.c.l.s4 1983009808
        %v1510 = vunpack.c.0.s8 %v1509
        %v1511 = vlaneseq
        %v1512 = vshrl.u32 %v1511, 7
        %v1513 = vsub.s32 %v1510, %v1512
        %v1514 = vrot.slane %v1500, %v1513
        %v1515 = vcombine.low %v1491, %v1507
        %v1516 = vcombine.high %v1491, %v1507
        %v1518 = vunpack.c.l.s4 1934713408
        %v1519 = vunpack.c.0.s8 %v1518
        %v1520 = vlaneseq
        %v1521 = vshrl.u32 %v1520, 7
        %v1522 = vsub.s32 %v1519, %v1521
        %v1523 = vrot.slane %v1515, %v1522
        %v1525 = vunpack.c.l.s4 1934713408
        %v1526 = vunpack.c.0.s8 %v1525
        %v1527 = vlaneseq
        %v1528 = vshrl.u32 %v1527, 7
        %v1529 = vsub.s32 %v1526, %v1528
        %v1530 = vrot.slane %v1516, %v1529
        %v1531 = vcombine.low %v1498, %v1514
        %v1532 = vcombine.high %v1498, %v1514
        %v1534 = vunpack.c.l.s4 1934713408
        %v1535 = vunpack.c.0.s8 %v1534
        %v1536 = vlaneseq
        %v1537 = vshrl.u32 %v1536, 7
        %v1538 = vsub.s32 %v1535, %v1537
        %v1539 = vrot.slane %v1531, %v1538
        %v1541 = vunpack.c.l.s4 1934713408
        %v1542 = vunpack.c.0.s8 %v1541
        %v1543 = vlaneseq
        %v1544 = vshrl.u32 %v1543, 7
        %v1545 = vsub.s32 %v1542, %v1544
        %v1546 = vrot.slane %v1532, %v1545
        %v1547 = vcombine.high %v1523, 0.0
        %v1548 = vcombine.high %v1530, 0.0
        %v1549 = vcombine.high %v1539, 0.0
        %v1550 = vcombine.high %v1546, 0.0
        %1552 = vrot.lane.b32.xlu0 %v1479, 16
        %v1553 = vpop.permute.xlu0 %1552
        %1556 = vrot.lane.b32.xlu0 %v1462, 32
        %v1557 = vpop.permute.xlu0 %1556
        %1560 = vrot.lane.b32.xlu0 %v1480, 48
        %v1561 = vpop.permute.xlu0 %1560
        %1564 = vrot.lane.b32.xlu0 %v1471, 64
        %v1565 = vpop.permute.xlu0 %1564
        %1568 = vrot.lane.b32.xlu0 %v1481, 80
        %v1569 = vpop.permute.xlu0 %1568
        %1572 = vrot.lane.b32.xlu0 %v1478, 96
        %v1573 = vpop.permute.xlu0 %1572
        %1576 = vrot.lane.b32.xlu0 %v1482, 112
        %v1577 = vpop.permute.xlu0 %1576
        %1580 = vrot.lane.b32.xlu0 %v1547, 16
        %v1581 = vpop.permute.xlu0 %1580
        %1584 = vrot.lane.b32.xlu0 %v1530, 32
        %v1585 = vpop.permute.xlu0 %1584
        %1588 = vrot.lane.b32.xlu0 %v1548, 48
        %v1589 = vpop.permute.xlu0 %1588
        %1592 = vrot.lane.b32.xlu0 %v1539, 64
        %v1593 = vpop.permute.xlu0 %1592
        %1596 = vrot.lane.b32.xlu0 %v1549, 80
        %v1597 = vpop.permute.xlu0 %1596
        %1600 = vrot.lane.b32.xlu0 %v1546, 96
        %v1601 = vpop.permute.xlu0 %1600
        %1604 = vrot.lane.b32.xlu0 %v1550, 112
        %v1605 = vpop.permute.xlu0 %1604
        %v1607 = vsel %vm380, %v1455, %v1553
        %v1608 = vsel %vm382, %v1607, %v1557
        %v1609 = vsel %vm384, %v1608, %v1561
        %v1610 = vsel %vm386, %v1609, %v1565
        %v1611 = vsel %vm388, %v1610, %v1569
        %v1612 = vsel %vm390, %v1611, %v1573
        %v1613 = vsel %vm392, %v1612, %v1577
        %v1614 = vsel %vm380, %v1523, %v1581
        %v1615 = vsel %vm382, %v1614, %v1585
        %v1616 = vsel %vm384, %v1615, %v1589
        %v1617 = vsel %vm386, %v1616, %v1593
        %v1618 = vsel %vm388, %v1617, %v1597
        %v1619 = vsel %vm390, %v1618, %v1601
        %v1620 = vsel %vm392, %v1619, %v1605
        %v1623 = vrot.slane %v1613, 4
        %v1624 = vrot.slane %v1620, 4
        %1627 = vst [vmem:[#allocation2 + $0x20] sm:$0xf0] %v1623
        %1628 = vst [vmem:[#allocation2 + $0x28] sm:$0xf0] %v1624
        %v1629 = vld [vmem:[%s175 + $0x2] sm:$0xff]
        %v1630 = vld [vmem:[%s175 + $0xa] sm:$0xff]
        %v1631 = vld [vmem:[%s175 + $0x1a] sm:$0xff]
        %v1632 = vld [vmem:[%s175 + $0x22] sm:$0xff]
        %v1633 = vld [vmem:[%s175 + $0x32] sm:$0xff]
        %v1634 = vld [vmem:[%s175 + $0x3a] sm:$0xff]
        %v1635 = vld [vmem:[%s175 + $0x4a] sm:$0xff]
        %v1636 = vld [vmem:[%s175 + $0x52] sm:$0xff]
        %v1637 = vcombine.low %v1629, %v1633
        %v1638 = vcombine.high %v1629, %v1633
        %v1640 = vunpack.c.l.s4 1983009808
        %v1641 = vunpack.c.0.s8 %v1640
        %v1642 = vlaneseq
        %v1643 = vshrl.u32 %v1642, 7
        %v1644 = vsub.s32 %v1641, %v1643
        %v1645 = vrot.slane %v1637, %v1644
        %v1647 = vunpack.c.l.s4 1983009808
        %v1648 = vunpack.c.0.s8 %v1647
        %v1649 = vlaneseq
        %v1650 = vshrl.u32 %v1649, 7
        %v1651 = vsub.s32 %v1648, %v1650
        %v1652 = vrot.slane %v1638, %v1651
        %v1653 = vcombine.low %v1631, %v1635
        %v1654 = vcombine.high %v1631, %v1635
        %v1656 = vunpack.c.l.s4 1983009808
        %v1657 = vunpack.c.0.s8 %v1656
        %v1658 = vlaneseq
        %v1659 = vshrl.u32 %v1658, 7
        %v1660 = vsub.s32 %v1657, %v1659
        %v1661 = vrot.slane %v1653, %v1660
        %v1663 = vunpack.c.l.s4 1983009808
        %v1664 = vunpack.c.0.s8 %v1663
        %v1665 = vlaneseq
        %v1666 = vshrl.u32 %v1665, 7
        %v1667 = vsub.s32 %v1664, %v1666
        %v1668 = vrot.slane %v1654, %v1667
        %v1669 = vcombine.low %v1645, %v1661
        %v1670 = vcombine.high %v1645, %v1661
        %v1672 = vunpack.c.l.s4 1934713408
        %v1673 = vunpack.c.0.s8 %v1672
        %v1674 = vlaneseq
        %v1675 = vshrl.u32 %v1674, 7
        %v1676 = vsub.s32 %v1673, %v1675
        %v1677 = vrot.slane %v1669, %v1676
        %v1679 = vunpack.c.l.s4 1934713408
        %v1680 = vunpack.c.0.s8 %v1679
        %v1681 = vlaneseq
        %v1682 = vshrl.u32 %v1681, 7
        %v1683 = vsub.s32 %v1680, %v1682
        %v1684 = vrot.slane %v1670, %v1683
        %v1685 = vcombine.low %v1652, %v1668
        %v1686 = vcombine.high %v1652, %v1668
        %v1688 = vunpack.c.l.s4 1934713408
        %v1689 = vunpack.c.0.s8 %v1688
        %v1690 = vlaneseq
        %v1691 = vshrl.u32 %v1690, 7
        %v1692 = vsub.s32 %v1689, %v1691
        %v1693 = vrot.slane %v1685, %v1692
        %v1695 = vunpack.c.l.s4 1934713408
        %v1696 = vunpack.c.0.s8 %v1695
        %v1697 = vlaneseq
        %v1698 = vshrl.u32 %v1697, 7
        %v1699 = vsub.s32 %v1696, %v1698
        %v1700 = vrot.slane %v1686, %v1699
        %v1701 = vcombine.high %v1677, 0.0
        %v1702 = vcombine.high %v1684, 0.0
        %v1703 = vcombine.high %v1693, 0.0
        %v1704 = vcombine.high %v1700, 0.0
        %v1705 = vcombine.low %v1630, %v1634
        %v1706 = vcombine.high %v1630, %v1634
        %v1708 = vunpack.c.l.s4 1983009808
        %v1709 = vunpack.c.0.s8 %v1708
        %v1710 = vlaneseq
        %v1711 = vshrl.u32 %v1710, 7
        %v1712 = vsub.s32 %v1709, %v1711
        %v1713 = vrot.slane %v1705, %v1712
        %v1715 = vunpack.c.l.s4 1983009808
        %v1716 = vunpack.c.0.s8 %v1715
        %v1717 = vlaneseq
        %v1718 = vshrl.u32 %v1717, 7
        %v1719 = vsub.s32 %v1716, %v1718
        %v1720 = vrot.slane %v1706, %v1719
        %v1721 = vcombine.low %v1632, %v1636
        %v1722 = vcombine.high %v1632, %v1636
        %v1724 = vunpack.c.l.s4 1983009808
        %v1725 = vunpack.c.0.s8 %v1724
        %v1726 = vlaneseq
        %v1727 = vshrl.u32 %v1726, 7
        %v1728 = vsub.s32 %v1725, %v1727
        %v1729 = vrot.slane %v1721, %v1728
        %v1731 = vunpack.c.l.s4 1983009808
        %v1732 = vunpack.c.0.s8 %v1731
        %v1733 = vlaneseq
        %v1734 = vshrl.u32 %v1733, 7
        %v1735 = vsub.s32 %v1732, %v1734
        %v1736 = vrot.slane %v1722, %v1735
        %v1737 = vcombine.low %v1713, %v1729
        %v1738 = vcombine.high %v1713, %v1729
        %v1740 = vunpack.c.l.s4 1934713408
        %v1741 = vunpack.c.0.s8 %v1740
        %v1742 = vlaneseq
        %v1743 = vshrl.u32 %v1742, 7
        %v1744 = vsub.s32 %v1741, %v1743
        %v1745 = vrot.slane %v1737, %v1744
        %v1747 = vunpack.c.l.s4 1934713408
        %v1748 = vunpack.c.0.s8 %v1747
        %v1749 = vlaneseq
        %v1750 = vshrl.u32 %v1749, 7
        %v1751 = vsub.s32 %v1748, %v1750
        %v1752 = vrot.slane %v1738, %v1751
        %v1753 = vcombine.low %v1720, %v1736
        %v1754 = vcombine.high %v1720, %v1736
        %v1756 = vunpack.c.l.s4 1934713408
        %v1757 = vunpack.c.0.s8 %v1756
        %v1758 = vlaneseq
        %v1759 = vshrl.u32 %v1758, 7
        %v1760 = vsub.s32 %v1757, %v1759
        %v1761 = vrot.slane %v1753, %v1760
        %v1763 = vunpack.c.l.s4 1934713408
        %v1764 = vunpack.c.0.s8 %v1763
        %v1765 = vlaneseq
        %v1766 = vshrl.u32 %v1765, 7
        %v1767 = vsub.s32 %v1764, %v1766
        %v1768 = vrot.slane %v1754, %v1767
        %v1769 = vcombine.high %v1745, 0.0
        %v1770 = vcombine.high %v1752, 0.0
        %v1771 = vcombine.high %v1761, 0.0
        %v1772 = vcombine.high %v1768, 0.0
        %1774 = vrot.lane.b32.xlu0 %v1701, 16
        %v1775 = vpop.permute.xlu0 %1774
        %1778 = vrot.lane.b32.xlu0 %v1684, 32
        %v1779 = vpop.permute.xlu0 %1778
        %1782 = vrot.lane.b32.xlu0 %v1702, 48
        %v1783 = vpop.permute.xlu0 %1782
        %1786 = vrot.lane.b32.xlu0 %v1693, 64
        %v1787 = vpop.permute.xlu0 %1786
        %1790 = vrot.lane.b32.xlu0 %v1703, 80
        %v1791 = vpop.permute.xlu0 %1790
        %1794 = vrot.lane.b32.xlu0 %v1700, 96
        %v1795 = vpop.permute.xlu0 %1794
        %1798 = vrot.lane.b32.xlu0 %v1704, 112
        %v1799 = vpop.permute.xlu0 %1798
        %1802 = vrot.lane.b32.xlu0 %v1769, 16
        %v1803 = vpop.permute.xlu0 %1802
        %1806 = vrot.lane.b32.xlu0 %v1752, 32
        %v1807 = vpop.permute.xlu0 %1806
        %1810 = vrot.lane.b32.xlu0 %v1770, 48
        %v1811 = vpop.permute.xlu0 %1810
        %1814 = vrot.lane.b32.xlu0 %v1761, 64
        %v1815 = vpop.permute.xlu0 %1814
        %1818 = vrot.lane.b32.xlu0 %v1771, 80
        %v1819 = vpop.permute.xlu0 %1818
        %1822 = vrot.lane.b32.xlu0 %v1768, 96
        %v1823 = vpop.permute.xlu0 %1822
        %1826 = vrot.lane.b32.xlu0 %v1772, 112
        %v1827 = vpop.permute.xlu0 %1826
        %v1829 = vsel %vm380, %v1677, %v1775
        %v1830 = vsel %vm382, %v1829, %v1779
        %v1831 = vsel %vm384, %v1830, %v1783
        %v1832 = vsel %vm386, %v1831, %v1787
        %v1833 = vsel %vm388, %v1832, %v1791
        %v1834 = vsel %vm390, %v1833, %v1795
        %v1835 = vsel %vm392, %v1834, %v1799
        %v1836 = vsel %vm380, %v1745, %v1803
        %v1837 = vsel %vm382, %v1836, %v1807
        %v1838 = vsel %vm384, %v1837, %v1811
        %v1839 = vsel %vm386, %v1838, %v1815
        %v1840 = vsel %vm388, %v1839, %v1819
        %v1841 = vsel %vm390, %v1840, %v1823
        %v1842 = vsel %vm392, %v1841, %v1827
        %1843 = vst [vmem:[#allocation2 + $0x30] sm:$0xf] %v1835
        %1844 = vst [vmem:[#allocation2 + $0x38] sm:$0xf] %v1842
        %v1845 = vld [vmem:[%s175 + $0x2] sm:$0xff]
        %v1846 = vld [vmem:[%s175 + $0xa] sm:$0xff]
        %v1847 = vld [vmem:[%s175 + $0x1a] sm:$0xff]
        %v1848 = vld [vmem:[%s175 + $0x22] sm:$0xff]
        %v1849 = vld [vmem:[%s175 + $0x32] sm:$0xff]
        %v1850 = vld [vmem:[%s175 + $0x3a] sm:$0xff]
        %v1851 = vld [vmem:[%s175 + $0x4a] sm:$0xff]
        %v1852 = vld [vmem:[%s175 + $0x52] sm:$0xff]
        %1861 = vrot.lane.b32.xlu0 %v1845, 127
        %v1862 = vpop.permute.xlu0 %1861
        %1863 = vrot.lane.b32.xlu0 %v1846, 127
        %v1864 = vpop.permute.xlu0 %1863
        %1865 = vrot.lane.b32.xlu0 %v1847, 127
        %v1866 = vpop.permute.xlu0 %1865
        %1867 = vrot.lane.b32.xlu0 %v1848, 127
        %v1868 = vpop.permute.xlu0 %1867
        %1869 = vrot.lane.b32.xlu0 %v1849, 127
        %v1870 = vpop.permute.xlu0 %1869
        %1871 = vrot.lane.b32.xlu0 %v1850, 127
        %v1872 = vpop.permute.xlu0 %1871
        %1873 = vrot.lane.b32.xlu0 %v1851, 127
        %v1874 = vpop.permute.xlu0 %1873
        %1875 = vrot.lane.b32.xlu0 %v1852, 127
        %v1876 = vpop.permute.xlu0 %1875
        %v1885 = vcombine.low %v1862, %v1870
        %v1886 = vcombine.high %v1862, %v1870
        %v1888 = vunpack.c.l.s4 1983009808
        %v1889 = vunpack.c.0.s8 %v1888
        %v1890 = vlaneseq
        %v1891 = vshrl.u32 %v1890, 7
        %v1892 = vsub.s32 %v1889, %v1891
        %v1893 = vrot.slane %v1885, %v1892
        %v1895 = vunpack.c.l.s4 1983009808
        %v1896 = vunpack.c.0.s8 %v1895
        %v1897 = vlaneseq
        %v1898 = vshrl.u32 %v1897, 7
        %v1899 = vsub.s32 %v1896, %v1898
        %v1900 = vrot.slane %v1886, %v1899
        %v1901 = vcombine.low %v1866, %v1874
        %v1902 = vcombine.high %v1866, %v1874
        %v1904 = vunpack.c.l.s4 1983009808
        %v1905 = vunpack.c.0.s8 %v1904
        %v1906 = vlaneseq
        %v1907 = vshrl.u32 %v1906, 7
        %v1908 = vsub.s32 %v1905, %v1907
        %v1909 = vrot.slane %v1901, %v1908
        %v1911 = vunpack.c.l.s4 1983009808
        %v1912 = vunpack.c.0.s8 %v1911
        %v1913 = vlaneseq
        %v1914 = vshrl.u32 %v1913, 7
        %v1915 = vsub.s32 %v1912, %v1914
        %v1916 = vrot.slane %v1902, %v1915
        %v1917 = vcombine.low %v1893, %v1909
        %v1918 = vcombine.high %v1893, %v1909
        %v1920 = vunpack.c.l.s4 1934713408
        %v1921 = vunpack.c.0.s8 %v1920
        %v1922 = vlaneseq
        %v1923 = vshrl.u32 %v1922, 7
        %v1924 = vsub.s32 %v1921, %v1923
        %v1925 = vrot.slane %v1917, %v1924
        %v1927 = vunpack.c.l.s4 1934713408
        %v1928 = vunpack.c.0.s8 %v1927
        %v1929 = vlaneseq
        %v1930 = vshrl.u32 %v1929, 7
        %v1931 = vsub.s32 %v1928, %v1930
        %v1932 = vrot.slane %v1918, %v1931
        %v1933 = vcombine.low %v1900, %v1916
        %v1934 = vcombine.high %v1900, %v1916
        %v1936 = vunpack.c.l.s4 1934713408
        %v1937 = vunpack.c.0.s8 %v1936
        %v1938 = vlaneseq
        %v1939 = vshrl.u32 %v1938, 7
        %v1940 = vsub.s32 %v1937, %v1939
        %v1941 = vrot.slane %v1933, %v1940
        %v1943 = vunpack.c.l.s4 1934713408
        %v1944 = vunpack.c.0.s8 %v1943
        %v1945 = vlaneseq
        %v1946 = vshrl.u32 %v1945, 7
        %v1947 = vsub.s32 %v1944, %v1946
        %v1948 = vrot.slane %v1934, %v1947
        %v1949 = vcombine.high %v1925, 0.0
        %v1950 = vcombine.high %v1932, 0.0
        %v1951 = vcombine.high %v1941, 0.0
        %v1952 = vcombine.high %v1948, 0.0
        %v1953 = vcombine.low %v1864, %v1872
        %v1954 = vcombine.high %v1864, %v1872
        %v1956 = vunpack.c.l.s4 1983009808
        %v1957 = vunpack.c.0.s8 %v1956
        %v1958 = vlaneseq
        %v1959 = vshrl.u32 %v1958, 7
        %v1960 = vsub.s32 %v1957, %v1959
        %v1961 = vrot.slane %v1953, %v1960
        %v1963 = vunpack.c.l.s4 1983009808
        %v1964 = vunpack.c.0.s8 %v1963
        %v1965 = vlaneseq
        %v1966 = vshrl.u32 %v1965, 7
        %v1967 = vsub.s32 %v1964, %v1966
        %v1968 = vrot.slane %v1954, %v1967
        %v1969 = vcombine.low %v1868, %v1876
        %v1970 = vcombine.high %v1868, %v1876
        %v1972 = vunpack.c.l.s4 1983009808
        %v1973 = vunpack.c.0.s8 %v1972
        %v1974 = vlaneseq
        %v1975 = vshrl.u32 %v1974, 7
        %v1976 = vsub.s32 %v1973, %v1975
        %v1977 = vrot.slane %v1969, %v1976
        %v1979 = vunpack.c.l.s4 1983009808
        %v1980 = vunpack.c.0.s8 %v1979
        %v1981 = vlaneseq
        %v1982 = vshrl.u32 %v1981, 7
        %v1983 = vsub.s32 %v1980, %v1982
        %v1984 = vrot.slane %v1970, %v1983
        %v1985 = vcombine.low %v1961, %v1977
        %v1986 = vcombine.high %v1961, %v1977
        %v1988 = vunpack.c.l.s4 1934713408
        %v1989 = vunpack.c.0.s8 %v1988
        %v1990 = vlaneseq
        %v1991 = vshrl.u32 %v1990, 7
        %v1992 = vsub.s32 %v1989, %v1991
        %v1993 = vrot.slane %v1985, %v1992
        %v1995 = vunpack.c.l.s4 1934713408
        %v1996 = vunpack.c.0.s8 %v1995
        %v1997 = vlaneseq
        %v1998 = vshrl.u32 %v1997, 7
        %v1999 = vsub.s32 %v1996, %v1998
        %v2000 = vrot.slane %v1986, %v1999
        %v2001 = vcombine.low %v1968, %v1984
        %v2002 = vcombine.high %v1968, %v1984
        %v2004 = vunpack.c.l.s4 1934713408
        %v2005 = vunpack.c.0.s8 %v2004
        %v2006 = vlaneseq
        %v2007 = vshrl.u32 %v2006, 7
        %v2008 = vsub.s32 %v2005, %v2007
        %v2009 = vrot.slane %v2001, %v2008
        %v2011 = vunpack.c.l.s4 1934713408
        %v2012 = vunpack.c.0.s8 %v2011
        %v2013 = vlaneseq
        %v2014 = vshrl.u32 %v2013, 7
        %v2015 = vsub.s32 %v2012, %v2014
        %v2016 = vrot.slane %v2002, %v2015
        %v2017 = vcombine.high %v1993, 0.0
        %v2018 = vcombine.high %v2000, 0.0
        %v2019 = vcombine.high %v2009, 0.0
        %v2020 = vcombine.high %v2016, 0.0
        %2022 = vrot.lane.b32.xlu0 %v1949, 16
        %v2023 = vpop.permute.xlu0 %2022
        %2026 = vrot.lane.b32.xlu0 %v1932, 32
        %v2027 = vpop.permute.xlu0 %2026
        %2030 = vrot.lane.b32.xlu0 %v1950, 48
        %v2031 = vpop.permute.xlu0 %2030
        %2034 = vrot.lane.b32.xlu0 %v1941, 64
        %v2035 = vpop.permute.xlu0 %2034
        %2038 = vrot.lane.b32.xlu0 %v1951, 80
        %v2039 = vpop.permute.xlu0 %2038
        %2042 = vrot.lane.b32.xlu0 %v1948, 96
        %v2043 = vpop.permute.xlu0 %2042
        %2046 = vrot.lane.b32.xlu0 %v1952, 112
        %v2047 = vpop.permute.xlu0 %2046
        %2050 = vrot.lane.b32.xlu0 %v2017, 16
        %v2051 = vpop.permute.xlu0 %2050
        %2054 = vrot.lane.b32.xlu0 %v2000, 32
        %v2055 = vpop.permute.xlu0 %2054
        %2058 = vrot.lane.b32.xlu0 %v2018, 48
        %v2059 = vpop.permute.xlu0 %2058
        %2062 = vrot.lane.b32.xlu0 %v2009, 64
        %v2063 = vpop.permute.xlu0 %2062
        %2066 = vrot.lane.b32.xlu0 %v2019, 80
        %v2067 = vpop.permute.xlu0 %2066
        %2070 = vrot.lane.b32.xlu0 %v2016, 96
        %v2071 = vpop.permute.xlu0 %2070
        %2074 = vrot.lane.b32.xlu0 %v2020, 112
        %v2075 = vpop.permute.xlu0 %2074
        %v2077 = vsel %vm380, %v1925, %v2023
        %v2078 = vsel %vm382, %v2077, %v2027
        %v2079 = vsel %vm384, %v2078, %v2031
        %v2080 = vsel %vm386, %v2079, %v2035
        %v2081 = vsel %vm388, %v2080, %v2039
        %v2082 = vsel %vm390, %v2081, %v2043
        %v2083 = vsel %vm392, %v2082, %v2047
        %v2084 = vsel %vm380, %v1993, %v2051
        %v2085 = vsel %vm382, %v2084, %v2055
        %v2086 = vsel %vm384, %v2085, %v2059
        %v2087 = vsel %vm386, %v2086, %v2063
        %v2088 = vsel %vm388, %v2087, %v2067
        %v2089 = vsel %vm390, %v2088, %v2071
        %v2090 = vsel %vm392, %v2089, %v2075
        %v2093 = vrot.slane %v2083, 4
        %v2094 = vrot.slane %v2090, 4
        %2097 = vst [vmem:[#allocation2 + $0x30] sm:$0xf0] %v2093
        %2098 = vst [vmem:[#allocation2 + $0x38] sm:$0xf0] %v2094
        %v2099 = vld [vmem:[%s175 + $0x2] sm:$0xff]
        %v2100 = vld [vmem:[%s175 + $0xa] sm:$0xff]
        %v2101 = vld [vmem:[%s175 + $0x1a] sm:$0xff]
        %v2102 = vld [vmem:[%s175 + $0x22] sm:$0xff]
        %v2103 = vld [vmem:[%s175 + $0x32] sm:$0xff]
        %v2104 = vld [vmem:[%s175 + $0x3a] sm:$0xff]
        %v2105 = vld [vmem:[%s175 + $0x4a] sm:$0xff]
        %v2106 = vld [vmem:[%s175 + $0x52] sm:$0xff]
        %2115 = vrot.lane.b32.xlu0 %v2099, 126
        %v2116 = vpop.permute.xlu0 %2115
        %2117 = vrot.lane.b32.xlu0 %v2100, 126
        %v2118 = vpop.permute.xlu0 %2117
        %2119 = vrot.lane.b32.xlu0 %v2101, 126
        %v2120 = vpop.permute.xlu0 %2119
        %2121 = vrot.lane.b32.xlu0 %v2102, 126
        %v2122 = vpop.permute.xlu0 %2121
        %2123 = vrot.lane.b32.xlu0 %v2103, 126
        %v2124 = vpop.permute.xlu0 %2123
        %2125 = vrot.lane.b32.xlu0 %v2104, 126
        %v2126 = vpop.permute.xlu0 %2125
        %2127 = vrot.lane.b32.xlu0 %v2105, 126
        %v2128 = vpop.permute.xlu0 %2127
        %2129 = vrot.lane.b32.xlu0 %v2106, 126
        %v2130 = vpop.permute.xlu0 %2129
        %v2139 = vcombine.low %v2116, %v2124
        %v2140 = vcombine.high %v2116, %v2124
        %v2142 = vunpack.c.l.s4 1983009808
        %v2143 = vunpack.c.0.s8 %v2142
        %v2144 = vlaneseq
        %v2145 = vshrl.u32 %v2144, 7
        %v2146 = vsub.s32 %v2143, %v2145
        %v2147 = vrot.slane %v2139, %v2146
        %v2149 = vunpack.c.l.s4 1983009808
        %v2150 = vunpack.c.0.s8 %v2149
        %v2151 = vlaneseq
        %v2152 = vshrl.u32 %v2151, 7
        %v2153 = vsub.s32 %v2150, %v2152
        %v2154 = vrot.slane %v2140, %v2153
        %v2155 = vcombine.low %v2120, %v2128
        %v2156 = vcombine.high %v2120, %v2128
        %v2158 = vunpack.c.l.s4 1983009808
        %v2159 = vunpack.c.0.s8 %v2158
        %v2160 = vlaneseq
        %v2161 = vshrl.u32 %v2160, 7
        %v2162 = vsub.s32 %v2159, %v2161
        %v2163 = vrot.slane %v2155, %v2162
        %v2165 = vunpack.c.l.s4 1983009808
        %v2166 = vunpack.c.0.s8 %v2165
        %v2167 = vlaneseq
        %v2168 = vshrl.u32 %v2167, 7
        %v2169 = vsub.s32 %v2166, %v2168
        %v2170 = vrot.slane %v2156, %v2169
        %v2171 = vcombine.low %v2147, %v2163
        %v2172 = vcombine.high %v2147, %v2163
        %v2174 = vunpack.c.l.s4 1934713408
        %v2175 = vunpack.c.0.s8 %v2174
        %v2176 = vlaneseq
        %v2177 = vshrl.u32 %v2176, 7
        %v2178 = vsub.s32 %v2175, %v2177
        %v2179 = vrot.slane %v2171, %v2178
        %v2181 = vunpack.c.l.s4 1934713408
        %v2182 = vunpack.c.0.s8 %v2181
        %v2183 = vlaneseq
        %v2184 = vshrl.u32 %v2183, 7
        %v2185 = vsub.s32 %v2182, %v2184
        %v2186 = vrot.slane %v2172, %v2185
        %v2187 = vcombine.low %v2154, %v2170
        %v2188 = vcombine.high %v2154, %v2170
        %v2190 = vunpack.c.l.s4 1934713408
        %v2191 = vunpack.c.0.s8 %v2190
        %v2192 = vlaneseq
        %v2193 = vshrl.u32 %v2192, 7
        %v2194 = vsub.s32 %v2191, %v2193
        %v2195 = vrot.slane %v2187, %v2194
        %v2197 = vunpack.c.l.s4 1934713408
        %v2198 = vunpack.c.0.s8 %v2197
        %v2199 = vlaneseq
        %v2200 = vshrl.u32 %v2199, 7
        %v2201 = vsub.s32 %v2198, %v2200
        %v2202 = vrot.slane %v2188, %v2201
        %v2203 = vcombine.high %v2179, 0.0
        %v2204 = vcombine.high %v2186, 0.0
        %v2205 = vcombine.high %v2195, 0.0
        %v2206 = vcombine.high %v2202, 0.0
        %v2207 = vcombine.low %v2118, %v2126
        %v2208 = vcombine.high %v2118, %v2126
        %v2210 = vunpack.c.l.s4 1983009808
        %v2211 = vunpack.c.0.s8 %v2210
        %v2212 = vlaneseq
        %v2213 = vshrl.u32 %v2212, 7
        %v2214 = vsub.s32 %v2211, %v2213
        %v2215 = vrot.slane %v2207, %v2214
        %v2217 = vunpack.c.l.s4 1983009808
        %v2218 = vunpack.c.0.s8 %v2217
        %v2219 = vlaneseq
        %v2220 = vshrl.u32 %v2219, 7
        %v2221 = vsub.s32 %v2218, %v2220
        %v2222 = vrot.slane %v2208, %v2221
        %v2223 = vcombine.low %v2122, %v2130
        %v2224 = vcombine.high %v2122, %v2130
        %v2226 = vunpack.c.l.s4 1983009808
        %v2227 = vunpack.c.0.s8 %v2226
        %v2228 = vlaneseq
        %v2229 = vshrl.u32 %v2228, 7
        %v2230 = vsub.s32 %v2227, %v2229
        %v2231 = vrot.slane %v2223, %v2230
        %v2233 = vunpack.c.l.s4 1983009808
        %v2234 = vunpack.c.0.s8 %v2233
        %v2235 = vlaneseq
        %v2236 = vshrl.u32 %v2235, 7
        %v2237 = vsub.s32 %v2234, %v2236
        %v2238 = vrot.slane %v2224, %v2237
        %v2239 = vcombine.low %v2215, %v2231
        %v2240 = vcombine.high %v2215, %v2231
        %v2242 = vunpack.c.l.s4 1934713408
        %v2243 = vunpack.c.0.s8 %v2242
        %v2244 = vlaneseq
        %v2245 = vshrl.u32 %v2244, 7
        %v2246 = vsub.s32 %v2243, %v2245
        %v2247 = vrot.slane %v2239, %v2246
        %v2249 = vunpack.c.l.s4 1934713408
        %v2250 = vunpack.c.0.s8 %v2249
        %v2251 = vlaneseq
        %v2252 = vshrl.u32 %v2251, 7
        %v2253 = vsub.s32 %v2250, %v2252
        %v2254 = vrot.slane %v2240, %v2253
        %v2255 = vcombine.low %v2222, %v2238
        %v2256 = vcombine.high %v2222, %v2238
        %v2258 = vunpack.c.l.s4 1934713408
        %v2259 = vunpack.c.0.s8 %v2258
        %v2260 = vlaneseq
        %v2261 = vshrl.u32 %v2260, 7
        %v2262 = vsub.s32 %v2259, %v2261
        %v2263 = vrot.slane %v2255, %v2262
        %v2265 = vunpack.c.l.s4 1934713408
        %v2266 = vunpack.c.0.s8 %v2265
        %v2267 = vlaneseq
        %v2268 = vshrl.u32 %v2267, 7
        %v2269 = vsub.s32 %v2266, %v2268
        %v2270 = vrot.slane %v2256, %v2269
        %v2271 = vcombine.high %v2247, 0.0
        %v2272 = vcombine.high %v2254, 0.0
        %v2273 = vcombine.high %v2263, 0.0
        %v2274 = vcombine.high %v2270, 0.0
        %2276 = vrot.lane.b32.xlu0 %v2203, 16
        %v2277 = vpop.permute.xlu0 %2276
        %2280 = vrot.lane.b32.xlu0 %v2186, 32
        %v2281 = vpop.permute.xlu0 %2280
        %2284 = vrot.lane.b32.xlu0 %v2204, 48
        %v2285 = vpop.permute.xlu0 %2284
        %2288 = vrot.lane.b32.xlu0 %v2195, 64
        %v2289 = vpop.permute.xlu0 %2288
        %2292 = vrot.lane.b32.xlu0 %v2205, 80
        %v2293 = vpop.permute.xlu0 %2292
        %2296 = vrot.lane.b32.xlu0 %v2202, 96
        %v2297 = vpop.permute.xlu0 %2296
        %2300 = vrot.lane.b32.xlu0 %v2206, 112
        %v2301 = vpop.permute.xlu0 %2300
        %2304 = vrot.lane.b32.xlu0 %v2271, 16
        %v2305 = vpop.permute.xlu0 %2304
        %2308 = vrot.lane.b32.xlu0 %v2254, 32
        %v2309 = vpop.permute.xlu0 %2308
        %2312 = vrot.lane.b32.xlu0 %v2272, 48
        %v2313 = vpop.permute.xlu0 %2312
        %2316 = vrot.lane.b32.xlu0 %v2263, 64
        %v2317 = vpop.permute.xlu0 %2316
        %2320 = vrot.lane.b32.xlu0 %v2273, 80
        %v2321 = vpop.permute.xlu0 %2320
        %2324 = vrot.lane.b32.xlu0 %v2270, 96
        %v2325 = vpop.permute.xlu0 %2324
        %2328 = vrot.lane.b32.xlu0 %v2274, 112
        %v2329 = vpop.permute.xlu0 %2328
        %v2331 = vsel %vm380, %v2179, %v2277
        %v2332 = vsel %vm382, %v2331, %v2281
        %v2333 = vsel %vm384, %v2332, %v2285
        %v2334 = vsel %vm386, %v2333, %v2289
        %v2335 = vsel %vm388, %v2334, %v2293
        %v2336 = vsel %vm390, %v2335, %v2297
        %v2337 = vsel %vm392, %v2336, %v2301
        %v2338 = vsel %vm380, %v2247, %v2305
        %v2339 = vsel %vm382, %v2338, %v2309
        %v2340 = vsel %vm384, %v2339, %v2313
        %v2341 = vsel %vm386, %v2340, %v2317
        %v2342 = vsel %vm388, %v2341, %v2321
        %v2343 = vsel %vm390, %v2342, %v2325
        %v2344 = vsel %vm392, %v2343, %v2329
        %2345 = vst [vmem:[#allocation2 + $0x40] sm:$0xf] %v2337
        %2346 = vst [vmem:[#allocation2 + $0x48] sm:$0xf] %v2344
        %v2347 = vld [vmem:[%s1] sm:$0xff]
        %v2348 = vld [vmem:[#allocation2] sm:$0xff]
        %v2349 = vld [vmem:[#allocation2 + $0x8] sm:$0xff]
        %v2350 = vld [vmem:[#allocation2 + $0x10] sm:$0xff]
        %v2351 = vld [vmem:[#allocation2 + $0x18] sm:$0xff]
        %v2352 = vld [vmem:[#allocation2 + $0x20] sm:$0xff]
        %v2353 = vld [vmem:[#allocation2 + $0x28] sm:$0xff]
        %v2354 = vld [vmem:[#allocation2 + $0x30] sm:$0xff]
        %v2355 = vld [vmem:[#allocation2 + $0x38] sm:$0xff]
        %v2356 = vld [vmem:[#allocation2 + $0x40] sm:$0xf]
        %v2357 = vld [vmem:[#allocation2 + $0x48] sm:$0xf]
        %vm2358 = vcmask 293888
        %v2360 = vsel %vm2358, %v2347, 0
        %vm2362 = vcmask 1043456
        %v2364 = vsel %vm2362, %v2356, 0
        %v2367 = vsel %vm2362, %v2357, 0
        %2369 = vmatprep.subr.mxu0 0.0
        %2370 = vmatpush1.msra.mxu0 0.0
        %2371 = vmatprep.subr.mxu0 0.0
        %2372 = vmatpush1.msra.mxu0 0.0
        %2373 = vmatprep.subr.mxu0 0.0
        %2374 = vmatpush1.msra.mxu0 0.0
        %2375 = vmatprep.subr.mxu0 0.0
        %2376 = vmatpush1.msra.mxu0 0.0
        %2377 = vmatprep.subr.mxu0 0.0
        %2378 = vmatpush1.msra.mxu0 0.0
        %2379 = vmatprep.subr.mxu0 0.0
        %2380 = vmatpush1.msra.mxu0 0.0
        %2381 = vmatprep.subr.mxu0 0.0
        %2382 = vmatpush1.msra.mxu0 0.0
        %2383 = vmatprep.subr.mxu0 0.0
        %2384 = vmatpush1.msra.mxu0 0.0
        %2385 = vmatprep.subr.mxu0 0.0
        %2386 = vmatpush1.msra.mxu0 0.0
        %2387 = vmatprep.subr.mxu0 0.0
        %2388 = vmatpush1.msra.mxu0 0.0
        %2389 = vmatprep.subr.mxu0 0.0
        %2390 = vmatpush1.msra.mxu0 0.0
        %2391 = vmatprep.subr.mxu0 %v2367
        %2392 = vmatpush1.msra.mxu0 %v2364
        %2393 = vmatprep.subr.mxu0 %v2355
        %2394 = vmatpush1.msra.mxu0 %v2354
        %2395 = vmatprep.subr.mxu0 %v2353
        %2396 = vmatpush1.msra.mxu0 %v2352
        %2397 = vmatprep.subr.mxu0 %v2351
        %2398 = vmatpush1.msra.mxu0 %v2350
        %2399 = vmatprep.subr.mxu0 %v2349
        %2400 = vmatpush1.msra.mxu0 %v2348
        %2401 = vmatprep.subr.mxu0 0.0
        %2402 = vmatpush2.msra.mxu0 0.0
        %2403 = vmatprep.subr.mxu0 0.0
        %2404 = vmatpush2.msra.mxu0 0.0
        %2405 = vmatprep.subr.mxu0 0.0
        %2406 = vmatpush2.msra.mxu0 0.0
        %2407 = vmatprep.subr.mxu0 0.0
        %2408 = vmatpush2.msra.mxu0 0.0
        %2409 = vmatprep.subr.mxu0 0.0
        %2410 = vmatpush2.msra.mxu0 0.0
        %2411 = vmatprep.subr.mxu0 0.0
        %2412 = vmatpush2.msra.mxu0 0.0
        %2413 = vmatprep.subr.mxu0 0.0
        %2414 = vmatpush2.msra.mxu0 0.0
        %2415 = vmatprep.subr.mxu0 0.0
        %2416 = vmatpush2.msra.mxu0 0.0
        %2417 = vmatprep.subr.mxu0 0.0
        %2418 = vmatpush2.msra.mxu0 0.0
        %2419 = vmatprep.subr.mxu0 0.0
        %2420 = vmatpush2.msra.mxu0 0.0
        %2421 = vmatprep.subr.mxu0 0.0
        %2422 = vmatpush2.msra.mxu0 0.0
        %2423 = vmatprep.subr.mxu0 0.0
        %2424 = vmatpush2.msra.mxu0 0.0
        %2425 = vmatprep.subr.mxu0 0.0
        %2426 = vmatpush2.msra.mxu0 0.0
        %2427 = vmatprep.subr.mxu0 0.0
        %2428 = vmatpush2.msra.mxu0 0.0
        %2429 = vmatprep.subr.mxu0 0.0
        %2430 = vmatpush2.msra.mxu0 0.0
        %2431 = vmatprep.subr.mxu0 0.0
        %2432 = vmatpush2.msra.mxu0 0.0
        %2433 = vmatprep.mubr.f32.mxu0 0.0
        %2434 = vmatmul.mubr.f32.gmra.mxu0 %v2360
        %v2435 = vpop.f32.mrf.mxu0
        %v2436 = vadd.f32 0.0, %v2435
        %v2437 = vpop.f32.mrf.mxu0
        %v2438 = vadd.f32 0.0, %v2437
        %2439 = vdwg.mxu0
        %2440 = vst [vmem:[%s164] sm:$0xff] %v2436
        %2441 = vst [vmem:[%s164 + $0x8] sm:$0xff] %v2438
        %v2442 = vadd.f32 %v2436, %v2438
        %2443 = vadd.xlane.f32.xlu0 %v2442
        %v2444 = vpop.xlane.xlu0 %2443
        %vm2445 = vcmask 7168
        %2446 = vst.msk [vmem:[%s179] sm:$0xff] %vm2445, %v2444
        %v2447 = vmul.f32 %v2436, %v2436
        %v2448 = vmul.f32 %v2438, %v2438
        %v2449 = vadd.f32 %v2447, %v2448
        %2450 = vadd.xlane.f32.xlu0 %v2449
        %v2451 = vpop.xlane.xlu0 %2450
        %vm2452 = vcmask 15368
        %2453 = vst.msk [vmem:[%s179] sm:$0xff] %vm2452, %v2451
        %s2454 = sand.u32 %s73, 1
        %s2455 = scalar_lea.sflag [#allocation4], %s2454
        %s2456 = sand.u32 %s73, 1
        %s2457 = smul.addr %s2456, 16
        %s2458 = scalar_lea.vmem [#allocation3], %s2457
        %p2459 = scmp.lt.s32.totalorder %s18, 1
        %s2460 = scalar_select %p2459, %s18, 1
        %s2461 = smul.addr %s2460, 8
        %s2462 = scalar_lea.vmem %s3, %s2461
        // Predicated region
        $region29: #{tpu_custom_call.1} parent=27 // pred_check
          %p2463 = pneg %p83
        $region30: #{tpu_custom_call.1} parent=27 // pred_check_branch
          %2465 = sbr.rel (%p2463) target = $region32
        $region31: #{tpu_custom_call.1} parent=27 // pred_region
          %s2467 = ssub.s32 256, 256
          %2468 = vsyncadd %s2455, %s2467
          %s2469 = smul.addr %s18, 2
          %s2470 = smul.addr %s2469, 128
          %s2471 = scalar_lea.hbm %s2, %s2470
          %s2473 = sshll.u32 %s2458, 4
          %s2474 = int_to_ptr.vmem [resolvable:$true] %s2473
          %2476 = dma.vmem_to_hbm [thread:$0]  %s2474, 256, %s2471, %s2455
        $region32: #{tpu_custom_call.1} parent=27 // pred_fallthru
          _
        // Predicated region
        $region33: #{tpu_custom_call.1} parent=27 // pred_check
          %p2477 = pneg %p109
        $region34: #{tpu_custom_call.1} parent=27 // pred_check_branch
          %2479 = sbr.rel (%p2477) target = $region36
        $region35: #{tpu_custom_call.1} parent=27 // pred_region
          _
        $region36: #{tpu_custom_call.1} parent=27 // pred_fallthru
          _
      $region28: #{tpu_custom_call.1} parent=5 // pred_fallthru
        _
      %p2480 = scmp.le.s32.totalorder 2, %s13
      // Predicated region
      $region37: #{tpu_custom_call.1} parent=5 // pred_check
        %p2481 = pneg %p2480
      $region38: #{tpu_custom_call.1} parent=5 // pred_check_branch
        %2483 = sbr.rel (%p2481) target = $region40
      $region39: #{tpu_custom_call.1} parent=5 // pred_region
        %s2484 = ssub.s32 %s13, 2
        // Predicated region
        $region41: #{tpu_custom_call.1} parent=39 // pred_check
          %p2485 = pneg %p89
        $region42: #{tpu_custom_call.1} parent=39 // pred_check_branch
          %2487 = sbr.rel (%p2485) target = $region44
        $region43: #{tpu_custom_call.1} parent=39 // pred_region
          %s2488 = sand.u32 %s74, 1
          %s2489 = scalar_lea.sflag [#allocation4], %s2488
          %s2490 = sand.u32 %s74, 1
          %s2491 = smul.addr %s2490, 16
          %s2492 = scalar_lea.vmem [#allocation3], %s2491
          %2493 = dma.done %s2489, 256
        $region44: #{tpu_custom_call.1} parent=39 // pred_fallthru
          _
        // Predicated region
        $region45: #{tpu_custom_call.1} parent=39 // pred_check
          %p2494 = pneg %p115
        $region46: #{tpu_custom_call.1} parent=39 // pred_check_branch
          %2496 = sbr.rel (%p2494) target = $region48
        $region47: #{tpu_custom_call.1} parent=39 // pred_region
          %p2497 = scmp.lt.s32.totalorder %s19, 1
          %s2498 = scalar_select %p2497, %s19, 1
          %s2499 = smul.addr %s2498, 8
          %s2500 = scalar_lea.vmem %s3, %s2499
        $region48: #{tpu_custom_call.1} parent=39 // pred_fallthru
          _
      $region40: #{tpu_custom_call.1} parent=5 // pred_fallthru
        _
    $region6: #{tpu_custom_call.1} parent=1 // loop_footer
      %s17 = sadd.s32 1, %s13
    $region7: #{tpu_custom_call.1} parent=1 // loop_footer_branch
      %12 = sbr.rel target = $region3
    $region8: #{tpu_custom_call.1} parent=1 // loop_exit
      _
    %2501 = vsyncpa [#allocation4], 1
    %s2502 = scalar_lea.sflag [#allocation4], 1
    %2503 = vsyncpa %s2502, 1

</llo_original>
